<compile_context>
chip_gen: v7x
topology: tpu7x:2x2x1
jax: 0.10.0
libtpu: 0.0.40
codegen_flags: <defaults>
</compile_context>

<pallas_src>
import functools

import jax
import jax.numpy as jnp
import numpy as np
from jax import lax
from jax.experimental import pallas as pl
from jax.experimental.pallas import tpu as pltpu

EPS = 1e-5


# ----------------------------- Pallas kernel --------------------------------

def _bn_relu(h, gamma, beta):
    """BatchNorm1d (training batch stats, biased var) + ReLU.

    h: (rows, 128) with lane = slice*32 + channel; per-lane statistics over all
    (batch, position) rows == BatchNorm1d applied independently per W-slice.
    """
    mean = jnp.mean(h, axis=0, keepdims=True)
    var = jnp.mean(jnp.square(h - mean), axis=0, keepdims=True)
    hn = (h - mean) * lax.rsqrt(var + EPS)
    return jnp.maximum(hn * gamma + beta, 0.0)


def channelnet_kernel(x_ref, w1_ref, b1_ref, g1_ref, be1_ref,
                      w2_ref, b2_ref, g2_ref, be2_ref,
                      o_ref, pool_ref, hp_ref, *, B, L):
    Lh = L // 2
    H = L // 4

    # ---- stage 1: Conv1d(1->8, k=3/5/7/9) x4 fused into one 9-tap conv.
    #      im2col along lanes (36 cols) -> one MXU matmul (B*L, 36) @ (36, 128).
    xv = x_ref[0]                                        # (B, L+8, 4), padded L
    cols = jnp.concatenate([xv[:, s:s + L, :] for s in range(9)], axis=2)
    h1 = jnp.dot(cols.reshape(B * L, 36), w1_ref[...],
                 preferred_element_type=jnp.float32)
    h1 = _bn_relu(h1 + b1_ref[...], g1_ref[...], be1_ref[...])   # (B*L, 128)

    # ---- pool1: MaxPool1d(2, 2). Rows are ordered (b*L + l) and L is even, so
    #      pool pairs are adjacent even/odd rows; use stride-2 scratch reads.
    pool_ref[...] = h1
    p1 = jnp.maximum(pool_ref[pl.ds(0, B * Lh, 2), :],
                     pool_ref[pl.ds(1, B * Lh, 2), :])           # (B*Lh, 128)

    # ---- stage-2 input with zero borders ('same' padding) — scratch, no concat.
    hp_ref[:, 0:2, :] = jnp.zeros((B, 2, 128), jnp.float32)
    hp_ref[:, Lh + 2:Lh + 4, :] = jnp.zeros((B, 2, 128), jnp.float32)
    hp_ref[:, 2:Lh + 2, :] = p1.reshape(B, Lh, 128)

    # ---- stage 2: Conv1d(32->16,k=3) ++ Conv1d(32->16,k=5) as 5 accumulating
    #      matmuls over shifted views; weights are 4x block-diagonal so the 4
    #      packed W-slices stay independent. K = N = 128, M = B*Lh.
    h2 = jnp.dot(hp_ref[:, 0:Lh, :].reshape(B * Lh, 128), w2_ref[0],
                 preferred_element_type=jnp.float32)
    for s in range(1, 5):
        h2 = h2 + jnp.dot(hp_ref[:, s:s + Lh, :].reshape(B * Lh, 128),
                          w2_ref[s], preferred_element_type=jnp.float32)
    h2 = _bn_relu(h2 + b2_ref[...], g2_ref[...], be2_ref[...])   # (B*Lh, 128)

    # ---- pool2 + lane-dense (128-wide) output store.
    pool_ref[0:B * Lh, :] = h2
    o_ref[0] = jnp.maximum(pool_ref[pl.ds(0, B * H, 2), :],
                           pool_ref[pl.ds(1, B * H, 2), :])      # (B*H, 128)
    # TODO(synk): MaxPool1d(return_indices=True) indices are unused by the
    # module's returned value, so they are not materialized here.


# ------------------------------ parameter glue -------------------------------

def make_params(key):
    ks = jax.random.split(key, 12)
    def w(k, shape):
        return (0.1 * jax.random.normal(k, shape)).astype(jnp.float32)
    p = {
        'w1_1': w(ks[0], (8, 1, 3)),  'b1_1': w(ks[1], (8,)),
        'w1_2': w(ks[2], (8, 1, 5)),  'b1_2': w(ks[3], (8,)),
        'w1_3': w(ks[4], (8, 1, 7)),  'b1_3': w(ks[5], (8,)),
        'w1_4': w(ks[6], (8, 1, 9)),  'b1_4': w(ks[7], (8,)),
        'w2_1': w(ks[8], (16, 32, 3)),  'b2_1': w(ks[9], (16,)),
        'w2_2': w(ks[10], (16, 32, 5)), 'b2_2': w(ks[11], (16,)),
        'g1': jnp.ones((32,), jnp.float32), 'be1': jnp.zeros((32,), jnp.float32),
        'g2': jnp.ones((32,), jnp.float32), 'be2': jnp.zeros((32,), jnp.float32),
    }
    return p


def pack_params(p):
    # ---- stage-1 single-slice weights (9 taps x 32 out channels); tap index is
    #      kernel offset shifted so all kernel sizes share the +/-4 padded input.
    w1s = jnp.zeros((9, 32), jnp.float32)
    for j, name in enumerate(['w1_1', 'w1_2', 'w1_3', 'w1_4']):
        w = p[name]                                   # (8, 1, K)
        K = w.shape[-1]
        pad = 4 - (K - 1) // 2
        w1s = w1s.at[pad:pad + K, 8 * j:8 * j + 8].set(jnp.transpose(w[:, 0, :]))
    # expand to (36, 128): row = tap*4 + slice, col = slice*32 + channel.
    w1p = jnp.zeros((9, 4, 4, 32), jnp.float32)
    for wsl in range(4):
        w1p = w1p.at[:, wsl, wsl, :].set(w1s)
    w1p = w1p.reshape(36, 128)
    b1p = jnp.tile(jnp.concatenate([p['b1_1'], p['b1_2'], p['b1_3'], p['b1_4']]),
                   4)[None, :]
    g1p = jnp.tile(p['g1'], 4)[None, :]
    be1p = jnp.tile(p['be1'], 4)[None, :]

    # ---- stage-2 single-slice weights (5 taps, 32 in, 32 out).
    w2s = jnp.zeros((5, 32, 32), jnp.float32)
    for j, name in enumerate(['w2_1', 'w2_2']):
        w = p[name]                                   # (16, 32, K)
        K = w.shape[-1]
        pad = 2 - (K - 1) // 2
        for k in range(K):
            w2s = w2s.at[pad + k, :, 16 * j:16 * j + 16].set(
                jnp.transpose(w[:, :, k]))
    # block-diagonal expand to (5, 128, 128): 4 independent packed W-slices.
    w2p = jnp.zeros((5, 4, 32, 4, 32), jnp.float32)
    for wsl in range(4):
        w2p = w2p.at[:, wsl, :, wsl, :].set(w2s)
    w2p = w2p.reshape(5, 128, 128)
    b2p = jnp.tile(jnp.concatenate([p['b2_1'], p['b2_2']]), 4)[None, :]
    g2p = jnp.tile(p['g2'], 4)[None, :]
    be2p = jnp.tile(p['be2'], 4)[None, :]

    return w1p, b1p, g1p, be1p, w2p, b2p, g2p, be2p


# ------------------------------ wrapper ---------------------------------------

@functools.partial(jax.jit, static_argnames=('hidden_size',))
def channelnet_forward(x, params, hidden_size):
    B, C, L, W = x.shape
    assert C == 1 and L == 4 * hidden_size
    # TODO(synk): general L would need relayout-tolerant reshapes (or padded-L
    # BN correction); the kernel requires the sequence length divisible by 16.
    assert L % 16 == 0, "kernel requires L (= 4*hidden_size) divisible by 16"
    w1p, b1p, g1p, be1p, w2p, b2p, g2p, be2p = pack_params(params)

    H = hidden_size
    Lh = L // 2
    Lp = L + 8
    Wp = -(-W // 4) * 4                                  # pad W to multiple of 4
    G = Wp // 4

    xs = x[:, 0, :, :].astype(jnp.float32)               # (B, L, W)
    if Wp != W:
        xs = jnp.pad(xs, ((0, 0), (0, 0), (0, Wp - W)))
    xs = jnp.pad(xs, ((0, 0), (4, 4), (0, 0)))           # (B, L+8, Wp)
    xk = jnp.transpose(xs.reshape(B, Lp, G, 4), (2, 0, 1, 3))   # (G, B, Lp, 4)

    kern = functools.partial(channelnet_kernel, B=B, L=L)
    out = pl.pallas_call(
        kern,
        out_shape=jax.ShapeDtypeStruct((G, B * H, 128), jnp.float32),
        grid=(G,),
        in_specs=[
            pl.BlockSpec((1, B, Lp, 4), lambda i: (i, 0, 0, 0)),
            pl.BlockSpec((36, 128), lambda i: (0, 0)),
            pl.BlockSpec((1, 128), lambda i: (0, 0)),
            pl.BlockSpec((1, 128), lambda i: (0, 0)),
            pl.BlockSpec((1, 128), lambda i: (0, 0)),
            pl.BlockSpec((5, 128, 128), lambda i: (0, 0, 0)),
            pl.BlockSpec((1, 128), lambda i: (0, 0)),
            pl.BlockSpec((1, 128), lambda i: (0, 0)),
            pl.BlockSpec((1, 128), lambda i: (0, 0)),
        ],
        out_specs=pl.BlockSpec((1, B * H, 128), lambda i: (i, 0, 0)),
        scratch_shapes=[
            pltpu.VMEM((B * L, 128), jnp.float32),        # pooling staging
            pltpu.VMEM((B, Lh + 4, 128), jnp.float32),    # zero-bordered stage-2 in
        ],
        compiler_params=pltpu.CompilerParams(
            dimension_semantics=("parallel",),
            vmem_limit_bytes=32 * 1024 * 1024),
    )(xk, w1p, b1p, g1p, be1p, w2p, b2p, g2p, be2p)

    # unpack: (G, B*H, 128) -> (B, 32, H, W)   [lane = slice*32 + channel]
    out = out.reshape(G, B, H, 4, 32)
    out = jnp.transpose(out, (1, 4, 2, 0, 3)).reshape(B, 32, H, Wp)
    return out[:, :, :, :W]


# ------------------------- pure-JAX reference (for checking) -----------------

def _conv1d_ref(x, w, b, pad):
    y = lax.conv_general_dilated(x, w, (1,), [(pad, pad)],
                                 dimension_numbers=('NCH', 'OIH', 'NCH'))
    return y + b[None, :, None]


def _bn_relu_ref(e, gamma, beta):
    m = jnp.mean(e, axis=(0, 2), keepdims=True)
    v = jnp.mean((e - m) ** 2, axis=(0, 2), keepdims=True)
    e = (e - m) * lax.rsqrt(v + EPS) * gamma[None, :, None] + beta[None, :, None]
    return jnp.maximum(e, 0.0)


def _pool_ref(e):
    B, C, L = e.shape
    return jnp.max(e.reshape(B, C, L // 2, 2), axis=-1)


def cnn1_ref(x, p):
    e = jnp.concatenate([_conv1d_ref(x, p['w1_1'], p['b1_1'], 1),
                         _conv1d_ref(x, p['w1_2'], p['b1_2'], 2),
                         _conv1d_ref(x, p['w1_3'], p['b1_3'], 3),
                         _conv1d_ref(x, p['w1_4'], p['b1_4'], 4)], axis=1)
    e = _pool_ref(_bn_relu_ref(e, p['g1'], p['be1']))
    e = jnp.concatenate([_conv1d_ref(e, p['w2_1'], p['b2_1'], 1),
                         _conv1d_ref(e, p['w2_2'], p['b2_2'], 2)], axis=1)
    e = _pool_ref(_bn_relu_ref(e, p['g2'], p['be2']))
    return e


def channelnet_ref(x, p):
    W = x.shape[3]
    return jnp.stack([cnn1_ref(x[:, :, :, i], p) for i in range(W)], axis=-1)


# ------------------------------ main ------------------------------------------

if __name__ == "__main__":
    key = jax.random.PRNGKey(0)
    kx, kp = jax.random.split(key)

    B, L, W = 2, 32, 8                 # x: (B, 1, L, W); hidden_size = L // 4
    hidden = L // 4
    x = jax.random.normal(kx, (B, 1, L, W), dtype=jnp.float32)
    params = make_params(kp)

    out = channelnet_forward(x, params, hidden)
    out = jax.block_until_ready(out)
    assert out.shape == (B, 32, hidden, W)

    ref = channelnet_ref(x, params)
    np.testing.assert_allclose(np.asarray(out), np.asarray(ref),
                               rtol=1e-3, atol=1e-3)
    print("KERNEL_OK")
</pallas_src>

<mosaic_0001>
module attributes {stable_mosaic.version = 11 : i64} {
  func.func @channelnet_kernel(%arg0: i32, %arg1: memref<1x2x40x4xf32, #tpu.memory_space<vmem>>, %arg2: memref<36x128xf32, #tpu.memory_space<vmem>>, %arg3: memref<1x128xf32, #tpu.memory_space<vmem>>, %arg4: memref<1x128xf32, #tpu.memory_space<vmem>>, %arg5: memref<1x128xf32, #tpu.memory_space<vmem>>, %arg6: memref<5x128x128xf32, #tpu.memory_space<vmem>>, %arg7: memref<1x128xf32, #tpu.memory_space<vmem>>, %arg8: memref<1x128xf32, #tpu.memory_space<vmem>>, %arg9: memref<1x128xf32, #tpu.memory_space<vmem>>, %arg10: memref<1x16x128xf32, #tpu.memory_space<vmem>>, %arg11: memref<64x128xf32, #tpu.memory_space<vmem>>, %arg12: memref<2x20x128xf32, #tpu.memory_space<vmem>>) attributes {dimension_semantics = [#tpu.dimension_semantics<parallel>], iteration_bounds = array<i64: 2>, scalar_prefetch = 0 : i64, scratch_operands = 2 : i64, tpu.core_type = #tpu.core_type<tc>, window_params = [{transform_indices = @transform_0, window_bounds = array<i64: 1, 2, 40, 4>}, {pipeline_mode = #tpu.pipeline_mode<synchronous>, transform_indices = @transform_1, window_bounds = array<i64: 36, 128>}, {pipeline_mode = #tpu.pipeline_mode<synchronous>, transform_indices = @transform_2, window_bounds = array<i64: 1, 128>}, {pipeline_mode = #tpu.pipeline_mode<synchronous>, transform_indices = @transform_3, window_bounds = array<i64: 1, 128>}, {pipeline_mode = #tpu.pipeline_mode<synchronous>, transform_indices = @transform_4, window_bounds = array<i64: 1, 128>}, {pipeline_mode = #tpu.pipeline_mode<synchronous>, transform_indices = @transform_5, window_bounds = array<i64: 5, 128, 128>}, {pipeline_mode = #tpu.pipeline_mode<synchronous>, transform_indices = @transform_6, window_bounds = array<i64: 1, 128>}, {pipeline_mode = #tpu.pipeline_mode<synchronous>, transform_indices = @transform_7, window_bounds = array<i64: 1, 128>}, {pipeline_mode = #tpu.pipeline_mode<synchronous>, transform_indices = @transform_8, window_bounds = array<i64: 1, 128>}, {transform_indices = @transform_9, window_bounds = array<i64: 1, 16, 128>}]} {
    %c0 = arith.constant 0 : index
    %c0_0 = arith.constant 0 : index
    %c0_1 = arith.constant 0 : index
    %c0_2 = arith.constant 0 : index
    %0 = vector.load %arg1[%c0, %c0_0, %c0_1, %c0_2] : memref<1x2x40x4xf32, #tpu.memory_space<vmem>>, vector<1x2x40x4xf32>
    %1 = vector.shape_cast %0 : vector<1x2x40x4xf32> to vector<2x40x4xf32>
    %2 = vector.extract_strided_slice %1 {offsets = [0, 0, 0], sizes = [2, 32, 4], strides = [1, 1, 1]} : vector<2x40x4xf32> to vector<2x32x4xf32>
    %3 = vector.extract_strided_slice %1 {offsets = [0, 1, 0], sizes = [2, 32, 4], strides = [1, 1, 1]} : vector<2x40x4xf32> to vector<2x32x4xf32>
    %4 = vector.extract_strided_slice %1 {offsets = [0, 2, 0], sizes = [2, 32, 4], strides = [1, 1, 1]} : vector<2x40x4xf32> to vector<2x32x4xf32>
    %5 = vector.extract_strided_slice %1 {offsets = [0, 3, 0], sizes = [2, 32, 4], strides = [1, 1, 1]} : vector<2x40x4xf32> to vector<2x32x4xf32>
    %6 = vector.extract_strided_slice %1 {offsets = [0, 4, 0], sizes = [2, 32, 4], strides = [1, 1, 1]} : vector<2x40x4xf32> to vector<2x32x4xf32>
    %7 = vector.extract_strided_slice %1 {offsets = [0, 5, 0], sizes = [2, 32, 4], strides = [1, 1, 1]} : vector<2x40x4xf32> to vector<2x32x4xf32>
    %8 = vector.extract_strided_slice %1 {offsets = [0, 6, 0], sizes = [2, 32, 4], strides = [1, 1, 1]} : vector<2x40x4xf32> to vector<2x32x4xf32>
    %9 = vector.extract_strided_slice %1 {offsets = [0, 7, 0], sizes = [2, 32, 4], strides = [1, 1, 1]} : vector<2x40x4xf32> to vector<2x32x4xf32>
    %10 = vector.extract_strided_slice %1 {offsets = [0, 8, 0], sizes = [2, 32, 4], strides = [1, 1, 1]} : vector<2x40x4xf32> to vector<2x32x4xf32>
    %11 = tpu.concatenate %2, %3, %4, %5, %6, %7, %8, %9, %10 in 2 : vector<2x32x4xf32>, vector<2x32x4xf32>, vector<2x32x4xf32>, vector<2x32x4xf32>, vector<2x32x4xf32>, vector<2x32x4xf32>, vector<2x32x4xf32>, vector<2x32x4xf32>, vector<2x32x4xf32> -> vector<2x32x36xf32>
    %12 = vector.shape_cast %11 : vector<2x32x36xf32> to vector<64x36xf32>
    %c0_3 = arith.constant 0 : index
    %c0_4 = arith.constant 0 : index
    %13 = vector.load %arg2[%c0_3, %c0_4] : memref<36x128xf32, #tpu.memory_space<vmem>>, vector<36x128xf32>
    %cst = arith.constant dense<0.000000e+00> : vector<64x128xf32>
    %14 = tpu.matmul %12, %13, %cst {dimension_numbers = #tpu.dot_dimension_numbers<[1], [0], [0], [1], [0, 0, 1, 1], [], []>} : vector<64x36xf32>, vector<36x128xf32>, vector<64x128xf32> -> vector<64x128xf32>
    %c0_5 = arith.constant 0 : index
    %c0_6 = arith.constant 0 : index
    %15 = vector.load %arg3[%c0_5, %c0_6] : memref<1x128xf32, #tpu.memory_space<vmem>>, vector<1x128xf32>
    %16 = vector.broadcast %15 : vector<1x128xf32> to vector<64x128xf32>
    %17 = arith.addf %14, %16 : vector<64x128xf32>
    %c0_7 = arith.constant 0 : index
    %c0_8 = arith.constant 0 : index
    %18 = vector.load %arg4[%c0_7, %c0_8] : memref<1x128xf32, #tpu.memory_space<vmem>>, vector<1x128xf32>
    %c0_9 = arith.constant 0 : index
    %c0_10 = arith.constant 0 : index
    %19 = vector.load %arg5[%c0_9, %c0_10] : memref<1x128xf32, #tpu.memory_space<vmem>>, vector<1x128xf32>
    %cst_11 = arith.constant dense<0.000000e+00> : vector<128xf32>
    %20 = vector.multi_reduction <add>, %17, %cst_11 [0] : vector<64x128xf32> to vector<128xf32>
    %21 = vector.shape_cast %20 : vector<128xf32> to vector<1x128xf32>
    %cst_12 = arith.constant 6.400000e+01 : f32
    %22 = vector.broadcast %cst_12 : f32 to vector<1x128xf32>
    %23 = arith.divf %21, %22 : vector<1x128xf32>
    %24 = vector.broadcast %23 : vector<1x128xf32> to vector<64x128xf32>
    %25 = arith.subf %17, %24 : vector<64x128xf32>
    %26 = arith.mulf %25, %25 : vector<64x128xf32>
    %cst_13 = arith.constant dense<0.000000e+00> : vector<128xf32>
    %27 = vector.multi_reduction <add>, %26, %cst_13 [0] : vector<64x128xf32> to vector<128xf32>
    %28 = vector.shape_cast %27 : vector<128xf32> to vector<1x128xf32>
    %cst_14 = arith.constant 6.400000e+01 : f32
    %29 = vector.broadcast %cst_14 : f32 to vector<1x128xf32>
    %30 = arith.divf %28, %29 : vector<1x128xf32>
    %31 = vector.broadcast %23 : vector<1x128xf32> to vector<64x128xf32>
    %32 = arith.subf %17, %31 : vector<64x128xf32>
    %cst_15 = arith.constant 9.99999974E-6 : f32
    %33 = vector.broadcast %cst_15 : f32 to vector<1x128xf32>
    %34 = arith.addf %30, %33 : vector<1x128xf32>
    %35 = math.rsqrt %34 : vector<1x128xf32>
    %36 = vector.broadcast %35 : vector<1x128xf32> to vector<64x128xf32>
    %37 = arith.mulf %32, %36 : vector<64x128xf32>
    %38 = vector.broadcast %18 : vector<1x128xf32> to vector<64x128xf32>
    %39 = arith.mulf %37, %38 : vector<64x128xf32>
    %40 = vector.broadcast %19 : vector<1x128xf32> to vector<64x128xf32>
    %41 = arith.addf %39, %40 : vector<64x128xf32>
    %cst_16 = arith.constant 0.000000e+00 : f32
    %42 = vector.broadcast %cst_16 : f32 to vector<64x128xf32>
    %43 = arith.maximumf %41, %42 : vector<64x128xf32>
    %c0_17 = arith.constant 0 : index
    %c0_18 = arith.constant 0 : index
    %44 = vector.load %arg11[%c0_17, %c0_18] : memref<64x128xf32, #tpu.memory_space<vmem>>, vector<64x128xf32>
    tpu.vector_store %arg11[%c0_17, %c0_18], %43 {strides = array<i32>} : memref<64x128xf32, #tpu.memory_space<vmem>>, vector<64x128xf32>,
    %c0_19 = arith.constant 0 : index
    %c0_20 = arith.constant 0 : index
    %45 = tpu.strided_load %arg11[%c0_19, %c0_20] {strides = array<i32: 2, 1>} : memref<64x128xf32, #tpu.memory_space<vmem>>, vector<32x128xf32>
    %c1 = arith.constant 1 : index
    %c0_21 = arith.constant 0 : index
    %46 = tpu.strided_load %arg11[%c1, %c0_21] {strides = array<i32: 2, 1>} : memref<64x128xf32, #tpu.memory_space<vmem>>, vector<32x128xf32>
    %47 = arith.maximumf %45, %46 : vector<32x128xf32>
    %cst_22 = arith.constant 0.000000e+00 : f32
    %48 = vector.broadcast %cst_22 : f32 to vector<2x2x128xf32>
    %c0_23 = arith.constant 0 : index
    %c0_24 = arith.constant 0 : index
    %c0_25 = arith.constant 0 : index
    %49 = vector.load %arg12[%c0_23, %c0_24, %c0_25] : memref<2x20x128xf32, #tpu.memory_space<vmem>>, vector<2x2x128xf32>
    tpu.vector_store %arg12[%c0_23, %c0_24, %c0_25], %48 {strides = array<i32>} : memref<2x20x128xf32, #tpu.memory_space<vmem>>, vector<2x2x128xf32>,
    %cst_26 = arith.constant 0.000000e+00 : f32
    %50 = vector.broadcast %cst_26 : f32 to vector<2x2x128xf32>
    %c0_27 = arith.constant 0 : index
    %c18 = arith.constant 18 : index
    %c0_28 = arith.constant 0 : index
    %51 = vector.load %arg12[%c0_27, %c18, %c0_28] : memref<2x20x128xf32, #tpu.memory_space<vmem>>, vector<2x2x128xf32>
    tpu.vector_store %arg12[%c0_27, %c18, %c0_28], %50 {strides = array<i32>} : memref<2x20x128xf32, #tpu.memory_space<vmem>>, vector<2x2x128xf32>,
    %52 = vector.shape_cast %47 : vector<32x128xf32> to vector<2x16x128xf32>
    %c0_29 = arith.constant 0 : index
    %c2 = arith.constant 2 : index
    %c0_30 = arith.constant 0 : index
    %53 = vector.load %arg12[%c0_29, %c2, %c0_30] : memref<2x20x128xf32, #tpu.memory_space<vmem>>, vector<2x16x128xf32>
    tpu.vector_store %arg12[%c0_29, %c2, %c0_30], %52 {strides = array<i32>} : memref<2x20x128xf32, #tpu.memory_space<vmem>>, vector<2x16x128xf32>,
    %c0_31 = arith.constant 0 : index
    %c0_32 = arith.constant 0 : index
    %c0_33 = arith.constant 0 : index
    %54 = vector.load %arg12[%c0_31, %c0_32, %c0_33] : memref<2x20x128xf32, #tpu.memory_space<vmem>>, vector<2x16x128xf32>
    %55 = vector.shape_cast %54 : vector<2x16x128xf32> to vector<32x128xf32>
    %c0_34 = arith.constant 0 : index
    %c0_35 = arith.constant 0 : index
    %c0_36 = arith.constant 0 : index
    %56 = vector.load %arg6[%c0_34, %c0_35, %c0_36] : memref<5x128x128xf32, #tpu.memory_space<vmem>>, vector<1x128x128xf32>
    %57 = vector.shape_cast %56 : vector<1x128x128xf32> to vector<128x128xf32>
    %cst_37 = arith.constant dense<0.000000e+00> : vector<32x128xf32>
    %58 = tpu.matmul %55, %57, %cst_37 {dimension_numbers = #tpu.dot_dimension_numbers<[1], [0], [0], [1], [0, 0, 1, 1], [], []>} : vector<32x128xf32>, vector<128x128xf32>, vector<32x128xf32> -> vector<32x128xf32>
    %c0_38 = arith.constant 0 : index
    %c1_39 = arith.constant 1 : index
    %c0_40 = arith.constant 0 : index
    %59 = vector.load %arg12[%c0_38, %c1_39, %c0_40] : memref<2x20x128xf32, #tpu.memory_space<vmem>>, vector<2x16x128xf32>
    %60 = vector.shape_cast %59 : vector<2x16x128xf32> to vector<32x128xf32>
    %c1_41 = arith.constant 1 : index
    %c0_42 = arith.constant 0 : index
    %c0_43 = arith.constant 0 : index
    %61 = vector.load %arg6[%c1_41, %c0_42, %c0_43] : memref<5x128x128xf32, #tpu.memory_space<vmem>>, vector<1x128x128xf32>
    %62 = vector.shape_cast %61 : vector<1x128x128xf32> to vector<128x128xf32>
    %cst_44 = arith.constant dense<0.000000e+00> : vector<32x128xf32>
    %63 = tpu.matmul %60, %62, %cst_44 {dimension_numbers = #tpu.dot_dimension_numbers<[1], [0], [0], [1], [0, 0, 1, 1], [], []>} : vector<32x128xf32>, vector<128x128xf32>, vector<32x128xf32> -> vector<32x128xf32>
    %64 = arith.addf %58, %63 : vector<32x128xf32>
    %c0_45 = arith.constant 0 : index
    %c2_46 = arith.constant 2 : index
    %c0_47 = arith.constant 0 : index
    %65 = vector.load %arg12[%c0_45, %c2_46, %c0_47] : memref<2x20x128xf32, #tpu.memory_space<vmem>>, vector<2x16x128xf32>
    %66 = vector.shape_cast %65 : vector<2x16x128xf32> to vector<32x128xf32>
    %c2_48 = arith.constant 2 : index
    %c0_49 = arith.constant 0 : index
    %c0_50 = arith.constant 0 : index
    %67 = vector.load %arg6[%c2_48, %c0_49, %c0_50] : memref<5x128x128xf32, #tpu.memory_space<vmem>>, vector<1x128x128xf32>
    %68 = vector.shape_cast %67 : vector<1x128x128xf32> to vector<128x128xf32>
    %cst_51 = arith.constant dense<0.000000e+00> : vector<32x128xf32>
    %69 = tpu.matmul %66, %68, %cst_51 {dimension_numbers = #tpu.dot_dimension_numbers<[1], [0], [0], [1], [0, 0, 1, 1], [], []>} : vector<32x128xf32>, vector<128x128xf32>, vector<32x128xf32> -> vector<32x128xf32>
    %70 = arith.addf %64, %69 : vector<32x128xf32>
    %c0_52 = arith.constant 0 : index
    %c3 = arith.constant 3 : index
    %c0_53 = arith.constant 0 : index
    %71 = vector.load %arg12[%c0_52, %c3, %c0_53] : memref<2x20x128xf32, #tpu.memory_space<vmem>>, vector<2x16x128xf32>
    %72 = vector.shape_cast %71 : vector<2x16x128xf32> to vector<32x128xf32>
    %c3_54 = arith.constant 3 : index
    %c0_55 = arith.constant 0 : index
    %c0_56 = arith.constant 0 : index
    %73 = vector.load %arg6[%c3_54, %c0_55, %c0_56] : memref<5x128x128xf32, #tpu.memory_space<vmem>>, vector<1x128x128xf32>
    %74 = vector.shape_cast %73 : vector<1x128x128xf32> to vector<128x128xf32>
    %cst_57 = arith.constant dense<0.000000e+00> : vector<32x128xf32>
    %75 = tpu.matmul %72, %74, %cst_57 {dimension_numbers = #tpu.dot_dimension_numbers<[1], [0], [0], [1], [0, 0, 1, 1], [], []>} : vector<32x128xf32>, vector<128x128xf32>, vector<32x128xf32> -> vector<32x128xf32>
    %76 = arith.addf %70, %75 : vector<32x128xf32>
    %c0_58 = arith.constant 0 : index
    %c4 = arith.constant 4 : index
    %c0_59 = arith.constant 0 : index
    %77 = vector.load %arg12[%c0_58, %c4, %c0_59] : memref<2x20x128xf32, #tpu.memory_space<vmem>>, vector<2x16x128xf32>
    %78 = vector.shape_cast %77 : vector<2x16x128xf32> to vector<32x128xf32>
    %c4_60 = arith.constant 4 : index
    %c0_61 = arith.constant 0 : index
    %c0_62 = arith.constant 0 : index
    %79 = vector.load %arg6[%c4_60, %c0_61, %c0_62] : memref<5x128x128xf32, #tpu.memory_space<vmem>>, vector<1x128x128xf32>
    %80 = vector.shape_cast %79 : vector<1x128x128xf32> to vector<128x128xf32>
    %cst_63 = arith.constant dense<0.000000e+00> : vector<32x128xf32>
    %81 = tpu.matmul %78, %80, %cst_63 {dimension_numbers = #tpu.dot_dimension_numbers<[1], [0], [0], [1], [0, 0, 1, 1], [], []>} : vector<32x128xf32>, vector<128x128xf32>, vector<32x128xf32> -> vector<32x128xf32>
    %82 = arith.addf %76, %81 : vector<32x128xf32>
    %c0_64 = arith.constant 0 : index
    %c0_65 = arith.constant 0 : index
    %83 = vector.load %arg7[%c0_64, %c0_65] : memref<1x128xf32, #tpu.memory_space<vmem>>, vector<1x128xf32>
    %84 = vector.broadcast %83 : vector<1x128xf32> to vector<32x128xf32>
    %85 = arith.addf %82, %84 : vector<32x128xf32>
    %c0_66 = arith.constant 0 : index
    %c0_67 = arith.constant 0 : index
    %86 = vector.load %arg8[%c0_66, %c0_67] : memref<1x128xf32, #tpu.memory_space<vmem>>, vector<1x128xf32>
    %c0_68 = arith.constant 0 : index
    %c0_69 = arith.constant 0 : index
    %87 = vector.load %arg9[%c0_68, %c0_69] : memref<1x128xf32, #tpu.memory_space<vmem>>, vector<1x128xf32>
    %cst_70 = arith.constant dense<0.000000e+00> : vector<128xf32>
    %88 = vector.multi_reduction <add>, %85, %cst_70 [0] : vector<32x128xf32> to vector<128xf32>
    %89 = vector.shape_cast %88 : vector<128xf32> to vector<1x128xf32>
    %cst_71 = arith.constant 3.200000e+01 : f32
    %90 = vector.broadcast %cst_71 : f32 to vector<1x128xf32>
    %91 = arith.divf %89, %90 : vector<1x128xf32>
    %92 = vector.broadcast %91 : vector<1x128xf32> to vector<32x128xf32>
    %93 = arith.subf %85, %92 : vector<32x128xf32>
    %94 = arith.mulf %93, %93 : vector<32x128xf32>
    %cst_72 = arith.constant dense<0.000000e+00> : vector<128xf32>
    %95 = vector.multi_reduction <add>, %94, %cst_72 [0] : vector<32x128xf32> to vector<128xf32>
    %96 = vector.shape_cast %95 : vector<128xf32> to vector<1x128xf32>
    %cst_73 = arith.constant 3.200000e+01 : f32
    %97 = vector.broadcast %cst_73 : f32 to vector<1x128xf32>
    %98 = arith.divf %96, %97 : vector<1x128xf32>
    %99 = vector.broadcast %91 : vector<1x128xf32> to vector<32x128xf32>
    %100 = arith.subf %85, %99 : vector<32x128xf32>
    %cst_74 = arith.constant 9.99999974E-6 : f32
    %101 = vector.broadcast %cst_74 : f32 to vector<1x128xf32>
    %102 = arith.addf %98, %101 : vector<1x128xf32>
    %103 = math.rsqrt %102 : vector<1x128xf32>
    %104 = vector.broadcast %103 : vector<1x128xf32> to vector<32x128xf32>
    %105 = arith.mulf %100, %104 : vector<32x128xf32>
    %106 = vector.broadcast %86 : vector<1x128xf32> to vector<32x128xf32>
    %107 = arith.mulf %105, %106 : vector<32x128xf32>
    %108 = vector.broadcast %87 : vector<1x128xf32> to vector<32x128xf32>
    %109 = arith.addf %107, %108 : vector<32x128xf32>
    %cst_75 = arith.constant 0.000000e+00 : f32
    %110 = vector.broadcast %cst_75 : f32 to vector<32x128xf32>
    %111 = arith.maximumf %109, %110 : vector<32x128xf32>
    %c0_76 = arith.constant 0 : index
    %c0_77 = arith.constant 0 : index
    %112 = vector.load %arg11[%c0_76, %c0_77] : memref<64x128xf32, #tpu.memory_space<vmem>>, vector<32x128xf32>
    tpu.vector_store %arg11[%c0_76, %c0_77], %111 {strides = array<i32>} : memref<64x128xf32, #tpu.memory_space<vmem>>, vector<32x128xf32>,
    %c0_78 = arith.constant 0 : index
    %c0_79 = arith.constant 0 : index
    %113 = tpu.strided_load %arg11[%c0_78, %c0_79] {strides = array<i32: 2, 1>} : memref<64x128xf32, #tpu.memory_space<vmem>>, vector<16x128xf32>
    %c1_80 = arith.constant 1 : index
    %c0_81 = arith.constant 0 : index
    %114 = tpu.strided_load %arg11[%c1_80, %c0_81] {strides = array<i32: 2, 1>} : memref<64x128xf32, #tpu.memory_space<vmem>>, vector<16x128xf32>
    %115 = arith.maximumf %113, %114 : vector<16x128xf32>
    %c0_82 = arith.constant 0 : index
    %c0_83 = arith.constant 0 : index
    %c0_84 = arith.constant 0 : index
    %116 = vector.load %arg10[%c0_82, %c0_83, %c0_84] : memref<1x16x128xf32, #tpu.memory_space<vmem>>, vector<1x16x128xf32>
    %117 = vector.shape_cast %116 : vector<1x16x128xf32> to vector<16x128xf32>
    %118 = vector.shape_cast %115 : vector<16x128xf32> to vector<1x16x128xf32>
    tpu.vector_store %arg10[%c0_82, %c0_83, %c0_84], %118 {strides = array<i32>} : memref<1x16x128xf32, #tpu.memory_space<vmem>>, vector<1x16x128xf32>,
    return
  }
  func.func @transform_0(%arg0: i32) -> (i32, i32, i32, i32) {
    %c0_i32 = arith.constant 0 : i32
    %c0_i32_0 = arith.constant 0 : i32
    %c0_i32_1 = arith.constant 0 : i32
    %c0_i32_2 = arith.constant 0 : i32
    return %arg0, %c0_i32, %c0_i32_0, %c0_i32_1 : i32, i32, i32, i32
  }
  func.func @transform_1(%arg0: i32) -> (i32, i32) {
    %c0_i32 = arith.constant 0 : i32
    %c0_i32_0 = arith.constant 0 : i32
    %c0_i32_1 = arith.constant 0 : i32
    return %c0_i32, %c0_i32_0 : i32, i32
  }
  func.func @transform_2(%arg0: i32) -> (i32, i32) {
    %c0_i32 = arith.constant 0 : i32
    %c0_i32_0 = arith.constant 0 : i32
    %c0_i32_1 = arith.constant 0 : i32
    return %c0_i32, %c0_i32_0 : i32, i32
  }
  func.func @transform_3(%arg0: i32) -> (i32, i32) {
    %c0_i32 = arith.constant 0 : i32
    %c0_i32_0 = arith.constant 0 : i32
    %c0_i32_1 = arith.constant 0 : i32
    return %c0_i32, %c0_i32_0 : i32, i32
  }
  func.func @transform_4(%arg0: i32) -> (i32, i32) {
    %c0_i32 = arith.constant 0 : i32
    %c0_i32_0 = arith.constant 0 : i32
    %c0_i32_1 = arith.constant 0 : i32
    return %c0_i32, %c0_i32_0 : i32, i32
  }
  func.func @transform_5(%arg0: i32) -> (i32, i32, i32) {
    %c0_i32 = arith.constant 0 : i32
    %c0_i32_0 = arith.constant 0 : i32
    %c0_i32_1 = arith.constant 0 : i32
    %c0_i32_2 = arith.constant 0 : i32
    return %c0_i32, %c0_i32_0, %c0_i32_1 : i32, i32, i32
  }
  func.func @transform_6(%arg0: i32) -> (i32, i32) {
    %c0_i32 = arith.constant 0 : i32
    %c0_i32_0 = arith.constant 0 : i32
    %c0_i32_1 = arith.constant 0 : i32
    return %c0_i32, %c0_i32_0 : i32, i32
  }
  func.func @transform_7(%arg0: i32) -> (i32, i32) {
    %c0_i32 = arith.constant 0 : i32
    %c0_i32_0 = arith.constant 0 : i32
    %c0_i32_1 = arith.constant 0 : i32
    return %c0_i32, %c0_i32_0 : i32, i32
  }
  func.func @transform_8(%arg0: i32) -> (i32, i32) {
    %c0_i32 = arith.constant 0 : i32
    %c0_i32_0 = arith.constant 0 : i32
    %c0_i32_1 = arith.constant 0 : i32
    return %c0_i32, %c0_i32_0 : i32, i32
  }
  func.func @transform_9(%arg0: i32) -> (i32, i32, i32) {
    %c0_i32 = arith.constant 0 : i32
    %c0_i32_0 = arith.constant 0 : i32
    %c0_i32_1 = arith.constant 0 : i32
    return %arg0, %c0_i32, %c0_i32_0 : i32, i32, i32
  }
}

</mosaic_0001>

<llo_original>
// kernel: tile.33
$region0: #{tile.33}
  #allocation0 [shape = 's32[1]{0}', space=sflag, size = 0x4, scoped, tag = 'scoped memory for tile.33']
  %s0 = inlined_call_operand.vmem [shape: f32[32], index: 0, kind: input, shape index: {}]
  %s1 = inlined_call_operand.vmem [shape: f32[4,32], index: 1, kind: output, shape index: {}]
  // Predicated region
  $region2: #{tile.33} parent=0 // pred_check
    _
  $region3: #{tile.33} parent=0 // pred_check_branch
    %3 = sbr.rel (0) target = $region5
  $region4: #{tile.33} parent=0 // pred_region
    _
  $region5: #{tile.33} parent=0 // pred_fallthru
    _
  %v4 = vld [vmem:[%s0] ss:$0 sm:$0xff]
  %5 = vst [vmem:[%s1] sm:$0xf] %v4

// kernel: tile.34
$region0: #{tile.34}
  %s0 = inlined_call_operand.vmem [shape: f32[4,32], index: 0, kind: input, shape index: {}]
  %s1 = inlined_call_operand.vmem [shape: f32[1,128], index: 1, kind: output, shape index: {}]
  $region1: #{tile.34} parent=0
    #allocation0 [shape = 'u8[4096]{0}', space=vmem, size = 0x1000, scoped, tag = 'scoped mem for output reshape']
    #allocation1 [shape = 'u8[4096]{0}', space=vmem, size = 0x1000, scoped, tag = 'scoped mem for input reshape']
    %s3 = sshllo.u32 0, 4
    %v4 = vld [vmem:[%s0] sm:%s3]
    %5 = vst [vmem:[#allocation1] sm:%s3] %v4
    %v6 = vld [vmem:[#allocation1] sm:$0x1]
    %vm7 = vcmask 261120
    %8 = vst.msk [vmem:[#allocation0] sm:$0x1] %vm7, %v6
    %s9 = scalar_lea.vmem [#allocation1], 3
    %v10 = vld [vmem:[%s9] sm:$0x1]
    %11 = vrot.lane.b32.xlu0 %v10, 96
    %v12 = vpop.permute.xlu0 %11
    %vm13 = vcmask 1048320
    %14 = vst.msk [vmem:[#allocation0] sm:$0x1] %vm13, %v12
    %s15 = scalar_lea.vmem [#allocation1], 2
    %v16 = vld [vmem:[%s15] sm:$0x1]
    %17 = vrot.lane.b32.xlu0 %v16, 64
    %v18 = vpop.permute.xlu0 %17
    %vm19 = vcmask 785920
    %20 = vst.msk [vmem:[#allocation0] sm:$0x1] %vm19, %v18
    %s21 = scalar_lea.vmem [#allocation1], 1
    %v22 = vld [vmem:[%s21] sm:$0x1]
    %23 = vrot.lane.b32.xlu0 %v22, 32
    %v24 = vpop.permute.xlu0 %23
    %vm25 = vcmask 523520
    %26 = vst.msk [vmem:[#allocation0] sm:$0x1] %vm25, %v24
    %s28 = sshllo.u32 0, 1
    %v30 = vld [vmem:[#allocation0] sm:%s28]
    %s31 = sshllo.u32 0, 1
    %32 = vst [vmem:[%s1] sm:%s31] %v30

// kernel: channelnet_forward.1
$region0: #{channelnet_forward.1}
  #allocation0 [shape = 'u32[]', space=smem, size = 0x4, offset = 0x4, fixed_abs, tag = 'smem constant byte address 0x4 - core index']
  #allocation1 [shape = 'u32[144,128]{1,0:T(1,128)}', space=vmem, size = 0x12000, scoped, tag = 'internal scratch']
  #allocation2 [shape = 'f32[64,128]{1,0:T(8,128)}', space=vmem, size = 0x8000, scoped, tag = 'scratch operand']
  #allocation3 [shape = 'f32[2,20,128]{2,1,0:T(8,128)}', space=vmem, size = 0x6000, scoped, tag = 'scratch operand']
  %s0 = inlined_call_operand.vmem [shape: f32[2,2,40,4], index: 0, kind: input, shape index: {}]
  %s1 = inlined_call_operand.vmem [shape: f32[36,128], index: 1, kind: input, shape index: {}]
  %s2 = inlined_call_operand.vmem [shape: f32[1,128], index: 2, kind: input, shape index: {}]
  %s3 = inlined_call_operand.vmem [shape: f32[1,128], index: 3, kind: input, shape index: {}]
  %s4 = inlined_call_operand.vmem [shape: f32[1,128], index: 4, kind: input, shape index: {}]
  %s5 = inlined_call_operand.vmem [shape: f32[5,128,128], index: 5, kind: input, shape index: {}]
  %s6 = inlined_call_operand.vmem [shape: f32[1,128], index: 6, kind: input, shape index: {}]
  %s7 = inlined_call_operand.vmem [shape: f32[1,128], index: 7, kind: input, shape index: {}]
  %s8 = inlined_call_operand.vmem [shape: f32[1,128], index: 8, kind: input, shape index: {}]
  %s9 = inlined_call_operand.vmem [shape: f32[2,16,128], index: 9, kind: output, shape index: {}]
  %s10 = sld [smem:[#allocation0]]
  $region69: #{channelnet_forward.1} parent=0
    _
  %s12 = ssub.s32 1, %s10
  %s13 = scalar_select 0, %s12, %s10
  loop: start=0, step=1, limit=4
  $region2: #{channelnet_forward.1} parent=0 // loop_pre_header
    _
  $region3: #{channelnet_forward.1} parent=0 // loop_header
    %s15 = sphi 0, %s19
    %p16 = scmp.ge.s32.totalorder %s15, 4
    %s25 = sphi 0, %s27
    %s28 = sphi 0, %s25
    %s29 = sphi 0, %s28
    %s45 = sphi 0, %s29
    %s49 = sphi 0, %s49
    %s51 = sphi 0, %s49
    %s52 = sphi 0, %s51
    %s66 = sphi 0, %s52
    %s70 = sphi 0, %s70
    %s72 = sphi 0, %s70
    %s73 = sphi 0, %s72
    %s87 = sphi 0, %s73
    %s91 = sphi 0, %s91
    %s93 = sphi 0, %s91
    %s94 = sphi 0, %s93
    %s108 = sphi 0, %s94
    %s112 = sphi 0, %s112
    %s114 = sphi 0, %s112
    %s115 = sphi 0, %s114
    %s129 = sphi 0, %s115
    %s133 = sphi 0, %s133
    %s135 = sphi 0, %s133
    %s136 = sphi 0, %s135
    %s150 = sphi 0, %s136
    %s154 = sphi 0, %s154
    %s156 = sphi 0, %s154
    %s157 = sphi 0, %s156
    %s171 = sphi 0, %s157
    %s175 = sphi 0, %s175
    %s177 = sphi 0, %s175
    %s178 = sphi 0, %s177
    %s192 = sphi 0, %s178
    %s196 = sphi 0, %s196
    %s198 = sphi 0, %s196
    %s199 = sphi 0, %s198
    %s213 = sphi 0, %s199
    %s219 = sphi 0, %s221
    %s222 = sphi 0, %s219
    %s223 = sphi 0, %s222
    %s239 = sphi 0, %s223
  $region4: #{channelnet_forward.1} parent=0 // loop_header_branch
    %18 = sbr.rel (%p16) target = $region8
  $region5: #{channelnet_forward.1} parent=0 // loop_body
    %s20 = ssub.s32 %s15, 1
    %s21 = ssub.s32 %s15, 2
    %s22 = sadd.s32 %s15, 1
    %s23 = ssub.s32 %s15, %s22
    %p24 = scmp.eq.s32.totalorder %s23, 0
    %s26 = sadd.s32 %s25, 1
    %s27 = scalar_select %p24, %s25, %s26
    %p30 = pneg %p24
    %p31 = scmp.eq.s32.totalorder %s15, 1
    %p32 = por %p30, %p31
    %p33 = scmp.ne.s32.totalorder %s25, %s28
    %p34 = scmp.eq.s32.totalorder %s15, 0
    %p35 = por %p33, %p34
    %p36 = scmp.ne.s32.totalorder %s25, %s28
    %p37 = scmp.eq.s32.totalorder %s20, 1
    %p38 = por %p36, %p37
    %p39 = scmp.ne.s32.totalorder %s28, %s29
    %p40 = scmp.eq.s32.totalorder %s20, 0
    %p41 = por %p39, %p40
    %p42 = scmp.ne.s32.totalorder %s28, %s29
    %p43 = scmp.eq.s32.totalorder %s21, 1
    %p44 = por %p42, %p43
    %p46 = scmp.ne.s32.totalorder %s29, %s45
    %p47 = scmp.eq.s32.totalorder %s21, 0
    %p48 = por %p46, %p47
    %s50 = sadd.s32 %s49, 1
    %p53 = scmp.eq.s32.totalorder %s15, 1
    %p54 = scmp.ne.s32.totalorder %s49, %s51
    %p55 = scmp.eq.s32.totalorder %s15, 0
    %p56 = por %p54, %p55
    %p57 = scmp.ne.s32.totalorder %s49, %s51
    %p58 = scmp.eq.s32.totalorder %s20, 1
    %p59 = por %p57, %p58
    %p60 = scmp.ne.s32.totalorder %s51, %s52
    %p61 = scmp.eq.s32.totalorder %s20, 0
    %p62 = por %p60, %p61
    %p63 = scmp.ne.s32.totalorder %s51, %s52
    %p64 = scmp.eq.s32.totalorder %s21, 1
    %p65 = por %p63, %p64
    %p67 = scmp.ne.s32.totalorder %s52, %s66
    %p68 = scmp.eq.s32.totalorder %s21, 0
    %p69 = por %p67, %p68
    %s71 = sadd.s32 %s70, 1
    %p74 = scmp.eq.s32.totalorder %s15, 1
    %p75 = scmp.ne.s32.totalorder %s70, %s72
    %p76 = scmp.eq.s32.totalorder %s15, 0
    %p77 = por %p75, %p76
    %p78 = scmp.ne.s32.totalorder %s70, %s72
    %p79 = scmp.eq.s32.totalorder %s20, 1
    %p80 = por %p78, %p79
    %p81 = scmp.ne.s32.totalorder %s72, %s73
    %p82 = scmp.eq.s32.totalorder %s20, 0
    %p83 = por %p81, %p82
    %p84 = scmp.ne.s32.totalorder %s72, %s73
    %p85 = scmp.eq.s32.totalorder %s21, 1
    %p86 = por %p84, %p85
    %p88 = scmp.ne.s32.totalorder %s73, %s87
    %p89 = scmp.eq.s32.totalorder %s21, 0
    %p90 = por %p88, %p89
    %s92 = sadd.s32 %s91, 1
    %p95 = scmp.eq.s32.totalorder %s15, 1
    %p96 = scmp.ne.s32.totalorder %s91, %s93
    %p97 = scmp.eq.s32.totalorder %s15, 0
    %p98 = por %p96, %p97
    %p99 = scmp.ne.s32.totalorder %s91, %s93
    %p100 = scmp.eq.s32.totalorder %s20, 1
    %p101 = por %p99, %p100
    %p102 = scmp.ne.s32.totalorder %s93, %s94
    %p103 = scmp.eq.s32.totalorder %s20, 0
    %p104 = por %p102, %p103
    %p105 = scmp.ne.s32.totalorder %s93, %s94
    %p106 = scmp.eq.s32.totalorder %s21, 1
    %p107 = por %p105, %p106
    %p109 = scmp.ne.s32.totalorder %s94, %s108
    %p110 = scmp.eq.s32.totalorder %s21, 0
    %p111 = por %p109, %p110
    %s113 = sadd.s32 %s112, 1
    %p116 = scmp.eq.s32.totalorder %s15, 1
    %p117 = scmp.ne.s32.totalorder %s112, %s114
    %p118 = scmp.eq.s32.totalorder %s15, 0
    %p119 = por %p117, %p118
    %p120 = scmp.ne.s32.totalorder %s112, %s114
    %p121 = scmp.eq.s32.totalorder %s20, 1
    %p122 = por %p120, %p121
    %p123 = scmp.ne.s32.totalorder %s114, %s115
    %p124 = scmp.eq.s32.totalorder %s20, 0
    %p125 = por %p123, %p124
    %p126 = scmp.ne.s32.totalorder %s114, %s115
    %p127 = scmp.eq.s32.totalorder %s21, 1
    %p128 = por %p126, %p127
    %p130 = scmp.ne.s32.totalorder %s115, %s129
    %p131 = scmp.eq.s32.totalorder %s21, 0
    %p132 = por %p130, %p131
    %s134 = sadd.s32 %s133, 1
    %p137 = scmp.eq.s32.totalorder %s15, 1
    %p138 = scmp.ne.s32.totalorder %s133, %s135
    %p139 = scmp.eq.s32.totalorder %s15, 0
    %p140 = por %p138, %p139
    %p141 = scmp.ne.s32.totalorder %s133, %s135
    %p142 = scmp.eq.s32.totalorder %s20, 1
    %p143 = por %p141, %p142
    %p144 = scmp.ne.s32.totalorder %s135, %s136
    %p145 = scmp.eq.s32.totalorder %s20, 0
    %p146 = por %p144, %p145
    %p147 = scmp.ne.s32.totalorder %s135, %s136
    %p148 = scmp.eq.s32.totalorder %s21, 1
    %p149 = por %p147, %p148
    %p151 = scmp.ne.s32.totalorder %s136, %s150
    %p152 = scmp.eq.s32.totalorder %s21, 0
    %p153 = por %p151, %p152
    %s155 = sadd.s32 %s154, 1
    %p158 = scmp.eq.s32.totalorder %s15, 1
    %p159 = scmp.ne.s32.totalorder %s154, %s156
    %p160 = scmp.eq.s32.totalorder %s15, 0
    %p161 = por %p159, %p160
    %p162 = scmp.ne.s32.totalorder %s154, %s156
    %p163 = scmp.eq.s32.totalorder %s20, 1
    %p164 = por %p162, %p163
    %p165 = scmp.ne.s32.totalorder %s156, %s157
    %p166 = scmp.eq.s32.totalorder %s20, 0
    %p167 = por %p165, %p166
    %p168 = scmp.ne.s32.totalorder %s156, %s157
    %p169 = scmp.eq.s32.totalorder %s21, 1
    %p170 = por %p168, %p169
    %p172 = scmp.ne.s32.totalorder %s157, %s171
    %p173 = scmp.eq.s32.totalorder %s21, 0
    %p174 = por %p172, %p173
    %s176 = sadd.s32 %s175, 1
    %p179 = scmp.eq.s32.totalorder %s15, 1
    %p180 = scmp.ne.s32.totalorder %s175, %s177
    %p181 = scmp.eq.s32.totalorder %s15, 0
    %p182 = por %p180, %p181
    %p183 = scmp.ne.s32.totalorder %s175, %s177
    %p184 = scmp.eq.s32.totalorder %s20, 1
    %p185 = por %p183, %p184
    %p186 = scmp.ne.s32.totalorder %s177, %s178
    %p187 = scmp.eq.s32.totalorder %s20, 0
    %p188 = por %p186, %p187
    %p189 = scmp.ne.s32.totalorder %s177, %s178
    %p190 = scmp.eq.s32.totalorder %s21, 1
    %p191 = por %p189, %p190
    %p193 = scmp.ne.s32.totalorder %s178, %s192
    %p194 = scmp.eq.s32.totalorder %s21, 0
    %p195 = por %p193, %p194
    %s197 = sadd.s32 %s196, 1
    %p200 = scmp.eq.s32.totalorder %s15, 1
    %p201 = scmp.ne.s32.totalorder %s196, %s198
    %p202 = scmp.eq.s32.totalorder %s15, 0
    %p203 = por %p201, %p202
    %p204 = scmp.ne.s32.totalorder %s196, %s198
    %p205 = scmp.eq.s32.totalorder %s20, 1
    %p206 = por %p204, %p205
    %p207 = scmp.ne.s32.totalorder %s198, %s199
    %p208 = scmp.eq.s32.totalorder %s20, 0
    %p209 = por %p207, %p208
    %p210 = scmp.ne.s32.totalorder %s198, %s199
    %p211 = scmp.eq.s32.totalorder %s21, 1
    %p212 = por %p210, %p211
    %p214 = scmp.ne.s32.totalorder %s199, %s213
    %p215 = scmp.eq.s32.totalorder %s21, 0
    %p216 = por %p214, %p215
    %s217 = ssub.s32 %s15, %s22
    %p218 = scmp.eq.s32.totalorder %s217, 0
    %s220 = sadd.s32 %s219, 1
    %s221 = scalar_select %p218, %s219, %s220
    %p224 = pneg %p218
    %p225 = scmp.eq.s32.totalorder %s15, 1
    %p226 = por %p224, %p225
    %p227 = scmp.ne.s32.totalorder %s219, %s222
    %p228 = scmp.eq.s32.totalorder %s15, 0
    %p229 = por %p227, %p228
    %p230 = scmp.ne.s32.totalorder %s219, %s222
    %p231 = scmp.eq.s32.totalorder %s20, 1
    %p232 = por %p230, %p231
    %p233 = scmp.ne.s32.totalorder %s222, %s223
    %p234 = scmp.eq.s32.totalorder %s20, 0
    %p235 = por %p233, %p234
    %p236 = scmp.ne.s32.totalorder %s222, %s223
    %p237 = scmp.eq.s32.totalorder %s21, 1
    %p238 = por %p236, %p237
    %p240 = scmp.ne.s32.totalorder %s223, %s239
    %p241 = scmp.eq.s32.totalorder %s21, 0
    %p242 = por %p240, %p241
    %p243 = scmp.le.s32.totalorder 1, %s15
    %p244 = scmp.lt.s32.totalorder %s15, 3
    %p245 = pnand %p243, %p244
    %p246 = pneg %p245
    // Predicated region
    $region9: #{channelnet_forward.1} parent=5 // pred_check
      _
    $region10: #{channelnet_forward.1} parent=5 // pred_check_branch
      %248 = sbr.rel (%p245) target = $region12
    $region11: #{channelnet_forward.1} parent=5 // pred_region
      %s249 = ssub.s32 %s15, 1
      // Predicated region
      $region13: #{channelnet_forward.1} parent=11 // pred_check
        %p250 = pneg %p62
      $region14: #{channelnet_forward.1} parent=11 // pred_check_branch
        %252 = sbr.rel (%p250) target = $region16
      $region15: #{channelnet_forward.1} parent=11 // pred_region
        _
      $region16: #{channelnet_forward.1} parent=11 // pred_fallthru
        _
      // Predicated region
      $region17: #{channelnet_forward.1} parent=11 // pred_check
        %p253 = pneg %p83
      $region18: #{channelnet_forward.1} parent=11 // pred_check_branch
        %255 = sbr.rel (%p253) target = $region20
      $region19: #{channelnet_forward.1} parent=11 // pred_region
        _
      $region20: #{channelnet_forward.1} parent=11 // pred_fallthru
        _
      // Predicated region
      $region21: #{channelnet_forward.1} parent=11 // pred_check
        %p256 = pneg %p104
      $region22: #{channelnet_forward.1} parent=11 // pred_check_branch
        %258 = sbr.rel (%p256) target = $region24
      $region23: #{channelnet_forward.1} parent=11 // pred_region
        _
      $region24: #{channelnet_forward.1} parent=11 // pred_fallthru
        _
      // Predicated region
      $region25: #{channelnet_forward.1} parent=11 // pred_check
        %p259 = pneg %p125
      $region26: #{channelnet_forward.1} parent=11 // pred_check_branch
        %261 = sbr.rel (%p259) target = $region28
      $region27: #{channelnet_forward.1} parent=11 // pred_region
        _
      $region28: #{channelnet_forward.1} parent=11 // pred_fallthru
        _
      // Predicated region
      $region29: #{channelnet_forward.1} parent=11 // pred_check
        %p262 = pneg %p146
      $region30: #{channelnet_forward.1} parent=11 // pred_check_branch
        %264 = sbr.rel (%p262) target = $region32
      $region31: #{channelnet_forward.1} parent=11 // pred_region
        _
      $region32: #{channelnet_forward.1} parent=11 // pred_fallthru
        _
      // Predicated region
      $region33: #{channelnet_forward.1} parent=11 // pred_check
        %p265 = pneg %p167
      $region34: #{channelnet_forward.1} parent=11 // pred_check_branch
        %267 = sbr.rel (%p265) target = $region36
      $region35: #{channelnet_forward.1} parent=11 // pred_region
        _
      $region36: #{channelnet_forward.1} parent=11 // pred_fallthru
        _
      // Predicated region
      $region37: #{channelnet_forward.1} parent=11 // pred_check
        %p268 = pneg %p188
      $region38: #{channelnet_forward.1} parent=11 // pred_check_branch
        %270 = sbr.rel (%p268) target = $region40
      $region39: #{channelnet_forward.1} parent=11 // pred_region
        _
      $region40: #{channelnet_forward.1} parent=11 // pred_fallthru
        _
      // Predicated region
      $region41: #{channelnet_forward.1} parent=11 // pred_check
        %p271 = pneg %p209
      $region42: #{channelnet_forward.1} parent=11 // pred_check_branch
        %273 = sbr.rel (%p271) target = $region44
      $region43: #{channelnet_forward.1} parent=11 // pred_region
        _
      $region44: #{channelnet_forward.1} parent=11 // pred_fallthru
        _
    $region12: #{channelnet_forward.1} parent=5 // pred_fallthru
      _
    %p274 = scmp.lt.s32.totalorder %s15, 2
    // Predicated region
    $region45: #{channelnet_forward.1} parent=5 // pred_check
      %p275 = pneg %p274
    $region46: #{channelnet_forward.1} parent=5 // pred_check_branch
      %277 = sbr.rel (%p275) target = $region48
    $region47: #{channelnet_forward.1} parent=5 // pred_region
      // Predicated region
      $region49: #{channelnet_forward.1} parent=47 // pred_check
        %p278 = pneg %p35
      $region50: #{channelnet_forward.1} parent=47 // pred_check_branch
        %280 = sbr.rel (%p278) target = $region52
      $region51: #{channelnet_forward.1} parent=47 // pred_region
        %p281 = scmp.lt.s32.totalorder %s15, 1
        %s282 = scalar_select %p281, %s15, 1
        %s283 = smul.addr %s282, 10
        %s284 = smul.addr %s283, 8
        %s285 = scalar_lea.vmem %s0, %s284
      $region52: #{channelnet_forward.1} parent=47 // pred_fallthru
        _
    $region48: #{channelnet_forward.1} parent=5 // pred_fallthru
      _
    %p286 = scmp.le.s32.totalorder 1, %s15
    %p287 = scmp.lt.s32.totalorder %s15, 3
    %p288 = pnand %p286, %p287
    %p289 = pneg %p288
    // Predicated region
    $region53: #{channelnet_forward.1} parent=5 // pred_check
      _
    $region54: #{channelnet_forward.1} parent=5 // pred_check_branch
      %291 = sbr.rel (%p288) target = $region56
    $region55: #{channelnet_forward.1} parent=5 // pred_region
      %s292 = ssub.s32 %s15, 1
      %p293 = scmp.lt.s32.totalorder %s20, 1
      %s294 = scalar_select %p293, %s20, 1
      %s295 = smul.addr %s294, 10
      %s296 = smul.addr %s295, 8
      %s297 = scalar_lea.vmem %s0, %s296
      %p298 = pneg %p41
      %p299 = pneg %p38
      %p300 = pneg %p62
      %p301 = pneg %p59
      %p302 = pneg %p83
      %p303 = pneg %p80
      %p304 = pneg %p104
      %p305 = pneg %p101
      %p306 = pneg %p125
      %p307 = pneg %p122
      %p308 = pneg %p146
      %p309 = pneg %p143
      %p310 = pneg %p167
      %p311 = pneg %p164
      %p312 = pneg %p188
      %p313 = pneg %p185
      %p314 = pneg %p209
      %p315 = pneg %p206
      %p316 = pneg %p235
      %p317 = pneg %p232
      %p318 = scmp.lt.s32.totalorder %s20, 1
      %s319 = scalar_select %p318, %s20, 1
      %s320 = smul.addr %s319, 2
      %s321 = smul.addr %s320, 8
      %s322 = scalar_lea.vmem %s9, %s321
      %p323 = scmp.lt.s32.totalorder %s20, 1
      %s324 = scalar_select %p323, %s20, 1
      %s325 = smul.addr %s324, 10
      %s326 = smul.addr %s325, 8
      %s327 = scalar_lea.vmem %s0, %s326
      %p328 = scmp.lt.s32.totalorder %s20, 1
      %s329 = scalar_select %p328, %s20, 1
      %s330 = smul.addr %s329, 2
      %s331 = smul.addr %s330, 8
      %s332 = scalar_lea.vmem %s9, %s331
      %v333 = vld [vmem:[%s327] sm:$0xff]
      %v334 = vld [vmem:[%s327 + $0x8] sm:$0xff]
      %v335 = vld [vmem:[%s327 + $0x10] sm:$0xff]
      %v336 = vld [vmem:[%s327 + $0x18] sm:$0xff]
      %v337 = vld [vmem:[%s327 + $0x20] sm:$0xff]
      %v338 = vld [vmem:[%s327 + $0x28] sm:$0xff]
      %v339 = vld [vmem:[%s327 + $0x30] sm:$0xff]
      %v340 = vld [vmem:[%s327 + $0x38] sm:$0xff]
      %v341 = vld [vmem:[%s327 + $0x40] sm:$0xff]
      %v342 = vld [vmem:[%s327 + $0x48] sm:$0xff]
      %vm353 = vcmask 1046528
      %v354 = vrot.slane %v333, 1
      %v355 = vrot.slane %v334, 1
      %v356 = vsel %vm353, %v354, %v355
      %v357 = vrot.slane %v335, 1
      %v358 = vsel %vm353, %v355, %v357
      %v359 = vrot.slane %v336, 1
      %v360 = vsel %vm353, %v357, %v359
      %v361 = vrot.slane %v337, 1
      %v362 = vsel %vm353, %v359, %v361
      %v363 = vrot.slane %v338, 1
      %v364 = vrot.slane %v339, 1
      %v365 = vsel %vm353, %v363, %v364
      %v366 = vrot.slane %v340, 1
      %v367 = vsel %vm353, %v364, %v366
      %v368 = vrot.slane %v341, 1
      %v369 = vsel %vm353, %v366, %v368
      %v370 = vrot.slane %v342, 1
      %v371 = vsel %vm353, %v368, %v370
      %372 = vrot.lane.b32.xlu0 %v356, 4
      %v373 = vpop.permute.xlu0 %372
      %374 = vrot.lane.b32.xlu0 %v358, 4
      %v375 = vpop.permute.xlu0 %374
      %376 = vrot.lane.b32.xlu0 %v360, 4
      %v377 = vpop.permute.xlu0 %376
      %378 = vrot.lane.b32.xlu0 %v362, 4
      %v379 = vpop.permute.xlu0 %378
      %380 = vrot.lane.b32.xlu0 %v365, 4
      %v381 = vpop.permute.xlu0 %380
      %382 = vrot.lane.b32.xlu0 %v367, 4
      %v383 = vpop.permute.xlu0 %382
      %384 = vrot.lane.b32.xlu0 %v369, 4
      %v385 = vpop.permute.xlu0 %384
      %386 = vrot.lane.b32.xlu0 %v371, 4
      %v387 = vpop.permute.xlu0 %386
      %vm396 = vcmask 1045504
      %v397 = vrot.slane %v333, 2
      %v398 = vrot.slane %v334, 2
      %v399 = vsel %vm396, %v397, %v398
      %v400 = vrot.slane %v335, 2
      %v401 = vsel %vm396, %v398, %v400
      %v402 = vrot.slane %v336, 2
      %v403 = vsel %vm396, %v400, %v402
      %v404 = vrot.slane %v337, 2
      %v405 = vsel %vm396, %v402, %v404
      %v406 = vrot.slane %v338, 2
      %v407 = vrot.slane %v339, 2
      %v408 = vsel %vm396, %v406, %v407
      %v409 = vrot.slane %v340, 2
      %v410 = vsel %vm396, %v407, %v409
      %v411 = vrot.slane %v341, 2
      %v412 = vsel %vm396, %v409, %v411
      %v413 = vrot.slane %v342, 2
      %v414 = vsel %vm396, %v411, %v413
      %415 = vrot.lane.b32.xlu0 %v399, 8
      %v416 = vpop.permute.xlu0 %415
      %417 = vrot.lane.b32.xlu0 %v401, 8
      %v418 = vpop.permute.xlu0 %417
      %419 = vrot.lane.b32.xlu0 %v403, 8
      %v420 = vpop.permute.xlu0 %419
      %421 = vrot.lane.b32.xlu0 %v405, 8
      %v422 = vpop.permute.xlu0 %421
      %423 = vrot.lane.b32.xlu0 %v408, 8
      %v424 = vpop.permute.xlu0 %423
      %425 = vrot.lane.b32.xlu0 %v410, 8
      %v426 = vpop.permute.xlu0 %425
      %427 = vrot.lane.b32.xlu0 %v412, 8
      %v428 = vpop.permute.xlu0 %427
      %429 = vrot.lane.b32.xlu0 %v414, 8
      %v430 = vpop.permute.xlu0 %429
      %vm439 = vcmask 1044480
      %v440 = vrot.slane %v333, 3
      %v441 = vrot.slane %v334, 3
      %v442 = vsel %vm439, %v440, %v441
      %v443 = vrot.slane %v335, 3
      %v444 = vsel %vm439, %v441, %v443
      %v445 = vrot.slane %v336, 3
      %v446 = vsel %vm439, %v443, %v445
      %v447 = vrot.slane %v337, 3
      %v448 = vsel %vm439, %v445, %v447
      %v449 = vrot.slane %v338, 3
      %v450 = vrot.slane %v339, 3
      %v451 = vsel %vm439, %v449, %v450
      %v452 = vrot.slane %v340, 3
      %v453 = vsel %vm439, %v450, %v452
      %v454 = vrot.slane %v341, 3
      %v455 = vsel %vm439, %v452, %v454
      %v456 = vrot.slane %v342, 3
      %v457 = vsel %vm439, %v454, %v456
      %458 = vrot.lane.b32.xlu0 %v442, 12
      %v459 = vpop.permute.xlu0 %458
      %460 = vrot.lane.b32.xlu0 %v444, 12
      %v461 = vpop.permute.xlu0 %460
      %462 = vrot.lane.b32.xlu0 %v446, 12
      %v463 = vpop.permute.xlu0 %462
      %464 = vrot.lane.b32.xlu0 %v448, 12
      %v465 = vpop.permute.xlu0 %464
      %466 = vrot.lane.b32.xlu0 %v451, 12
      %v467 = vpop.permute.xlu0 %466
      %468 = vrot.lane.b32.xlu0 %v453, 12
      %v469 = vpop.permute.xlu0 %468
      %470 = vrot.lane.b32.xlu0 %v455, 12
      %v471 = vpop.permute.xlu0 %470
      %472 = vrot.lane.b32.xlu0 %v457, 12
      %v473 = vpop.permute.xlu0 %472
      %vm482 = vcmask 1043456
      %v483 = vrot.slane %v333, 4
      %v484 = vrot.slane %v334, 4
      %v485 = vsel %vm482, %v483, %v484
      %v486 = vrot.slane %v335, 4
      %v487 = vsel %vm482, %v484, %v486
      %v488 = vrot.slane %v336, 4
      %v489 = vsel %vm482, %v486, %v488
      %v490 = vrot.slane %v337, 4
      %v491 = vsel %vm482, %v488, %v490
      %v492 = vrot.slane %v338, 4
      %v493 = vrot.slane %v339, 4
      %v494 = vsel %vm482, %v492, %v493
      %v495 = vrot.slane %v340, 4
      %v496 = vsel %vm482, %v493, %v495
      %v497 = vrot.slane %v341, 4
      %v498 = vsel %vm482, %v495, %v497
      %v499 = vrot.slane %v342, 4
      %v500 = vsel %vm482, %v497, %v499
      %501 = vrot.lane.b32.xlu0 %v485, 16
      %v502 = vpop.permute.xlu0 %501
      %503 = vrot.lane.b32.xlu0 %v487, 16
      %v504 = vpop.permute.xlu0 %503
      %505 = vrot.lane.b32.xlu0 %v489, 16
      %v506 = vpop.permute.xlu0 %505
      %507 = vrot.lane.b32.xlu0 %v491, 16
      %v508 = vpop.permute.xlu0 %507
      %509 = vrot.lane.b32.xlu0 %v494, 16
      %v510 = vpop.permute.xlu0 %509
      %511 = vrot.lane.b32.xlu0 %v496, 16
      %v512 = vpop.permute.xlu0 %511
      %513 = vrot.lane.b32.xlu0 %v498, 16
      %v514 = vpop.permute.xlu0 %513
      %515 = vrot.lane.b32.xlu0 %v500, 16
      %v516 = vpop.permute.xlu0 %515
      %vm525 = vcmask 1042432
      %v526 = vrot.slane %v333, 5
      %v527 = vrot.slane %v334, 5
      %v528 = vsel %vm525, %v526, %v527
      %v529 = vrot.slane %v335, 5
      %v530 = vsel %vm525, %v527, %v529
      %v531 = vrot.slane %v336, 5
      %v532 = vsel %vm525, %v529, %v531
      %v533 = vrot.slane %v337, 5
      %v534 = vsel %vm525, %v531, %v533
      %v535 = vrot.slane %v338, 5
      %v536 = vrot.slane %v339, 5
      %v537 = vsel %vm525, %v535, %v536
      %v538 = vrot.slane %v340, 5
      %v539 = vsel %vm525, %v536, %v538
      %v540 = vrot.slane %v341, 5
      %v541 = vsel %vm525, %v538, %v540
      %v542 = vrot.slane %v342, 5
      %v543 = vsel %vm525, %v540, %v542
      %544 = vrot.lane.b32.xlu0 %v528, 20
      %v545 = vpop.permute.xlu0 %544
      %546 = vrot.lane.b32.xlu0 %v530, 20
      %v547 = vpop.permute.xlu0 %546
      %548 = vrot.lane.b32.xlu0 %v532, 20
      %v549 = vpop.permute.xlu0 %548
      %550 = vrot.lane.b32.xlu0 %v534, 20
      %v551 = vpop.permute.xlu0 %550
      %552 = vrot.lane.b32.xlu0 %v537, 20
      %v553 = vpop.permute.xlu0 %552
      %554 = vrot.lane.b32.xlu0 %v539, 20
      %v555 = vpop.permute.xlu0 %554
      %556 = vrot.lane.b32.xlu0 %v541, 20
      %v557 = vpop.permute.xlu0 %556
      %558 = vrot.lane.b32.xlu0 %v543, 20
      %v559 = vpop.permute.xlu0 %558
      %vm568 = vcmask 1041408
      %v569 = vrot.slane %v333, 6
      %v570 = vrot.slane %v334, 6
      %v571 = vsel %vm568, %v569, %v570
      %v572 = vrot.slane %v335, 6
      %v573 = vsel %vm568, %v570, %v572
      %v574 = vrot.slane %v336, 6
      %v575 = vsel %vm568, %v572, %v574
      %v576 = vrot.slane %v337, 6
      %v577 = vsel %vm568, %v574, %v576
      %v578 = vrot.slane %v338, 6
      %v579 = vrot.slane %v339, 6
      %v580 = vsel %vm568, %v578, %v579
      %v581 = vrot.slane %v340, 6
      %v582 = vsel %vm568, %v579, %v581
      %v583 = vrot.slane %v341, 6
      %v584 = vsel %vm568, %v581, %v583
      %v585 = vrot.slane %v342, 6
      %v586 = vsel %vm568, %v583, %v585
      %587 = vrot.lane.b32.xlu0 %v571, 24
      %v588 = vpop.permute.xlu0 %587
      %589 = vrot.lane.b32.xlu0 %v573, 24
      %v590 = vpop.permute.xlu0 %589
      %591 = vrot.lane.b32.xlu0 %v575, 24
      %v592 = vpop.permute.xlu0 %591
      %593 = vrot.lane.b32.xlu0 %v577, 24
      %v594 = vpop.permute.xlu0 %593
      %595 = vrot.lane.b32.xlu0 %v580, 24
      %v596 = vpop.permute.xlu0 %595
      %597 = vrot.lane.b32.xlu0 %v582, 24
      %v598 = vpop.permute.xlu0 %597
      %599 = vrot.lane.b32.xlu0 %v584, 24
      %v600 = vpop.permute.xlu0 %599
      %601 = vrot.lane.b32.xlu0 %v586, 24
      %v602 = vpop.permute.xlu0 %601
      %vm611 = vcmask 1040384
      %v612 = vrot.slane %v333, 7
      %v613 = vrot.slane %v334, 7
      %v614 = vsel %vm611, %v612, %v613
      %v615 = vrot.slane %v335, 7
      %v616 = vsel %vm611, %v613, %v615
      %v617 = vrot.slane %v336, 7
      %v618 = vsel %vm611, %v615, %v617
      %v619 = vrot.slane %v337, 7
      %v620 = vsel %vm611, %v617, %v619
      %v621 = vrot.slane %v338, 7
      %v622 = vrot.slane %v339, 7
      %v623 = vsel %vm611, %v621, %v622
      %v624 = vrot.slane %v340, 7
      %v625 = vsel %vm611, %v622, %v624
      %v626 = vrot.slane %v341, 7
      %v627 = vsel %vm611, %v624, %v626
      %v628 = vrot.slane %v342, 7
      %v629 = vsel %vm611, %v626, %v628
      %630 = vrot.lane.b32.xlu0 %v614, 28
      %v631 = vpop.permute.xlu0 %630
      %632 = vrot.lane.b32.xlu0 %v616, 28
      %v633 = vpop.permute.xlu0 %632
      %634 = vrot.lane.b32.xlu0 %v618, 28
      %v635 = vpop.permute.xlu0 %634
      %636 = vrot.lane.b32.xlu0 %v620, 28
      %v637 = vpop.permute.xlu0 %636
      %638 = vrot.lane.b32.xlu0 %v623, 28
      %v639 = vpop.permute.xlu0 %638
      %640 = vrot.lane.b32.xlu0 %v625, 28
      %v641 = vpop.permute.xlu0 %640
      %642 = vrot.lane.b32.xlu0 %v627, 28
      %v643 = vpop.permute.xlu0 %642
      %644 = vrot.lane.b32.xlu0 %v629, 28
      %v645 = vpop.permute.xlu0 %644
      %654 = vrot.lane.b32.xlu0 %v334, 32
      %v655 = vpop.permute.xlu0 %654
      %656 = vrot.lane.b32.xlu0 %v335, 32
      %v657 = vpop.permute.xlu0 %656
      %658 = vrot.lane.b32.xlu0 %v336, 32
      %v659 = vpop.permute.xlu0 %658
      %660 = vrot.lane.b32.xlu0 %v337, 32
      %v661 = vpop.permute.xlu0 %660
      %662 = vrot.lane.b32.xlu0 %v339, 32
      %v663 = vpop.permute.xlu0 %662
      %664 = vrot.lane.b32.xlu0 %v340, 32
      %v665 = vpop.permute.xlu0 %664
      %666 = vrot.lane.b32.xlu0 %v341, 32
      %v667 = vpop.permute.xlu0 %666
      %668 = vrot.lane.b32.xlu0 %v342, 32
      %v669 = vpop.permute.xlu0 %668
      %vm678 = vcmask 31744
      %v679 = vsel %vm678, %v333, %v373
      %v680 = vsel %vm678, %v334, %v375
      %v681 = vsel %vm678, %v335, %v377
      %v682 = vsel %vm678, %v336, %v379
      %v683 = vsel %vm678, %v338, %v381
      %v684 = vsel %vm678, %v339, %v383
      %v685 = vsel %vm678, %v340, %v385
      %v686 = vsel %vm678, %v341, %v387
      %vm687 = vcmask 64512
      %v688 = vsel %vm687, %v679, %v416
      %v689 = vsel %vm687, %v680, %v418
      %v690 = vsel %vm687, %v681, %v420
      %v691 = vsel %vm687, %v682, %v422
      %v692 = vsel %vm687, %v683, %v424
      %v693 = vsel %vm687, %v684, %v426
      %v694 = vsel %vm687, %v685, %v428
      %v695 = vsel %vm687, %v686, %v430
      %vm696 = vcmask 97280
      %v697 = vsel %vm696, %v688, %v459
      %v698 = vsel %vm696, %v689, %v461
      %v699 = vsel %vm696, %v690, %v463
      %v700 = vsel %vm696, %v691, %v465
      %v701 = vsel %vm696, %v692, %v467
      %v702 = vsel %vm696, %v693, %v469
      %v703 = vsel %vm696, %v694, %v471
      %v704 = vsel %vm696, %v695, %v473
      %vm705 = vcmask 130048
      %v706 = vsel %vm705, %v697, %v502
      %v707 = vsel %vm705, %v698, %v504
      %v708 = vsel %vm705, %v699, %v506
      %v709 = vsel %vm705, %v700, %v508
      %v710 = vsel %vm705, %v701, %v510
      %v711 = vsel %vm705, %v702, %v512
      %v712 = vsel %vm705, %v703, %v514
      %v713 = vsel %vm705, %v704, %v516
      %vm714 = vcmask 162816
      %v715 = vsel %vm714, %v706, %v545
      %v716 = vsel %vm714, %v707, %v547
      %v717 = vsel %vm714, %v708, %v549
      %v718 = vsel %vm714, %v709, %v551
      %v719 = vsel %vm714, %v710, %v553
      %v720 = vsel %vm714, %v711, %v555
      %v721 = vsel %vm714, %v712, %v557
      %v722 = vsel %vm714, %v713, %v559
      %vm723 = vcmask 195584
      %v724 = vsel %vm723, %v715, %v588
      %v725 = vsel %vm723, %v716, %v590
      %v726 = vsel %vm723, %v717, %v592
      %v727 = vsel %vm723, %v718, %v594
      %v728 = vsel %vm723, %v719, %v596
      %v729 = vsel %vm723, %v720, %v598
      %v730 = vsel %vm723, %v721, %v600
      %v731 = vsel %vm723, %v722, %v602
      %vm732 = vcmask 228352
      %v733 = vsel %vm732, %v724, %v631
      %v734 = vsel %vm732, %v725, %v633
      %v735 = vsel %vm732, %v726, %v635
      %v736 = vsel %vm732, %v727, %v637
      %v737 = vsel %vm732, %v728, %v639
      %v738 = vsel %vm732, %v729, %v641
      %v739 = vsel %vm732, %v730, %v643
      %v740 = vsel %vm732, %v731, %v645
      %vm741 = vcmask 261120
      %v742 = vsel %vm741, %v733, %v655
      %v743 = vsel %vm741, %v734, %v657
      %v744 = vsel %vm741, %v735, %v659
      %v745 = vsel %vm741, %v736, %v661
      %v746 = vsel %vm741, %v737, %v663
      %v747 = vsel %vm741, %v738, %v665
      %v748 = vsel %vm741, %v739, %v667
      %v749 = vsel %vm741, %v740, %v669
      %v750 = vld [vmem:[%s1] sm:$0xff]
      %v751 = vld [vmem:[%s1 + $0x8] sm:$0xff]
      %v752 = vld [vmem:[%s1 + $0x10] sm:$0xff]
      %v753 = vld [vmem:[%s1 + $0x18] sm:$0xff]
      %v754 = vld [vmem:[%s1 + $0x20] sm:$0xf]
      %v755 = vld [vmem:[%s2] sm:$0x1]
      %v757 = vlaneseq
      %v758 = vshrl.u32 %v757, 7
      %v759 = vsub.s32 0, %v758
      %v760 = vrot.slane %v755, %v759
      %vm762 = vcmask 293888
      %v764 = vsel %vm762, %v742, 0
      %v767 = vsel %vm762, %v743, 0
      %v770 = vsel %vm762, %v744, 0
      %v773 = vsel %vm762, %v745, 0
      %v776 = vsel %vm762, %v746, 0
      %v779 = vsel %vm762, %v747, 0
      %v782 = vsel %vm762, %v748, 0
      %v785 = vsel %vm762, %v749, 0
      %v788 = vsel %vm482, %v754, 0
      %790 = vmatprep.subr.mxu0 0.0
      %791 = vmatpush1.msra.mxu0 %v750
      %792 = vmatprep.subr.mxu0 0.0
      %793 = vmatpush1.msra.mxu0 %v751
      %794 = vmatprep.subr.mxu0 0.0
      %795 = vmatpush1.msra.mxu0 %v752
      %796 = vmatprep.subr.mxu0 0.0
      %797 = vmatpush1.msra.mxu0 %v753
      %798 = vmatprep.subr.mxu0 0.0
      %799 = vmatpush1.msra.mxu0 %v788
      %800 = vmatprep.subr.mxu0 0.0
      %801 = vmatpush1.msra.mxu0 0.0
      %802 = vmatprep.subr.mxu0 0.0
      %803 = vmatpush1.msra.mxu0 0.0
      %804 = vmatprep.subr.mxu0 0.0
      %805 = vmatpush1.msra.mxu0 0.0
      %806 = vmatprep.subr.mxu0 0.0
      %807 = vmatpush1.msra.mxu0 0.0
      %808 = vmatprep.subr.mxu0 0.0
      %809 = vmatpush1.msra.mxu0 0.0
      %810 = vmatprep.subr.mxu0 0.0
      %811 = vmatpush1.msra.mxu0 0.0
      %812 = vmatprep.subr.mxu0 0.0
      %813 = vmatpush1.msra.mxu0 0.0
      %814 = vmatprep.subr.mxu0 0.0
      %815 = vmatpush1.msra.mxu0 0.0
      %816 = vmatprep.subr.mxu0 0.0
      %817 = vmatpush1.msra.mxu0 0.0
      %818 = vmatprep.subr.mxu0 0.0
      %819 = vmatpush1.msra.mxu0 0.0
      %820 = vmatprep.subr.mxu0 0.0
      %821 = vmatpush1.msra.mxu0 0.0
      %822 = vmatprep.subr.mxu0 0.0
      %823 = vmatpush1.msra.mxu0 0.0
      %824 = vmatprep.subr.mxu0 0.0
      %825 = vmatpush1.msra.mxu0 0.0
      %826 = vmatprep.subr.mxu0 0.0
      %827 = vmatpush1.msra.mxu0 0.0
      %828 = vmatprep.subr.mxu0 0.0
      %829 = vmatpush1.msra.mxu0 0.0
      %830 = vmatprep.subr.mxu0 0.0
      %831 = vmatpush1.msra.mxu0 0.0
      %832 = vmatprep.subr.mxu0 0.0
      %833 = vmatpush1.msra.mxu0 0.0
      %834 = vmatprep.subr.mxu0 0.0
      %835 = vmatpush1.msra.mxu0 0.0
      %836 = vmatprep.subr.mxu0 0.0
      %837 = vmatpush1.msra.mxu0 0.0
      %838 = vmatprep.subr.mxu0 0.0
      %839 = vmatpush1.msra.mxu0 0.0
      %840 = vmatprep.subr.mxu0 0.0
      %841 = vmatpush1.msra.mxu0 0.0
      %842 = vmatprep.subr.mxu0 0.0
      %843 = vmatpush1.msra.mxu0 0.0
      %844 = vmatprep.subr.mxu0 0.0
      %845 = vmatpush1.msra.mxu0 0.0
      %846 = vmatprep.subr.mxu0 0.0
      %847 = vmatpush1.msra.mxu0 0.0
      %848 = vmatprep.subr.mxu0 0.0
      %849 = vmatpush1.msra.mxu0 0.0
      %850 = vmatprep.subr.mxu0 0.0
      %851 = vmatpush1.msra.mxu0 0.0
      %852 = vmatprep.subr.mxu0 0.0
      %853 = vmatpush1.msra.mxu0 0.0
      %854 = vmatprep.mubr.f32.mxu0 0.0
      %855 = vmatmul.mubr.f32.gmra.mrb[0].mxu0 %v764
      %v856 = vpop.f32.mrb[0].mxu0
      %v857 = vadd.f32 %v760, %v856
      %v858 = vpop.f32.mrb[0].mxu0
      %859 = vmatprep.mubr.f32.mxu0 0.0
      %860 = vmatmul.mubr.f32.gmra.mrb[0].mxu0 %v767
      %v861 = vpop.f32.mrb[0].mxu0
      %v862 = vadd.f32 %v760, %v861
      %v863 = vpop.f32.mrb[0].mxu0
      %864 = vmatprep.mubr.f32.mxu0 0.0
      %865 = vmatmul.mubr.f32.gmra.mrb[0].mxu0 %v770
      %v866 = vpop.f32.mrb[0].mxu0
      %v867 = vadd.f32 %v760, %v866
      %v868 = vpop.f32.mrb[0].mxu0
      %869 = vmatprep.mubr.f32.mxu0 0.0
      %870 = vmatmul.mubr.f32.gmra.mrb[0].mxu0 %v773
      %v871 = vpop.f32.mrb[0].mxu0
      %v872 = vadd.f32 %v760, %v871
      %v873 = vpop.f32.mrb[0].mxu0
      %874 = vmatprep.mubr.f32.mxu0 0.0
      %875 = vmatmul.mubr.f32.gmra.mrb[0].mxu0 %v776
      %v876 = vpop.f32.mrb[0].mxu0
      %v877 = vadd.f32 %v760, %v876
      %v878 = vpop.f32.mrb[0].mxu0
      %879 = vmatprep.mubr.f32.mxu0 0.0
      %880 = vmatmul.mubr.f32.gmra.mrb[0].mxu0 %v779
      %v881 = vpop.f32.mrb[0].mxu0
      %v882 = vadd.f32 %v760, %v881
      %v883 = vpop.f32.mrb[0].mxu0
      %884 = vmatprep.mubr.f32.mxu0 0.0
      %885 = vmatmul.mubr.f32.gmra.mrb[0].mxu0 %v782
      %v886 = vpop.f32.mrb[0].mxu0
      %v887 = vadd.f32 %v760, %v886
      %v888 = vpop.f32.mrb[0].mxu0
      %889 = vmatprep.mubr.f32.mxu0 0.0
      %890 = vmatmul.mubr.f32.gmra.mrb[0].mxu0 %v785
      %v891 = vpop.f32.mrb[0].mxu0
      %v892 = vadd.f32 %v760, %v891
      %v893 = vpop.f32.mrb[0].mxu0
      %894 = vdwg.mxu0
      %v895 = vld [vmem:[%s3] sm:$0x1]
      %v896 = vld [vmem:[%s4] sm:$0x1]
      %v897 = vadd.f32 %v857, %v862
      %v898 = vadd.f32 %v897, %v867
      %v899 = vadd.f32 %v898, %v872
      %v900 = vadd.f32 %v899, %v877
      %v901 = vadd.f32 %v900, %v882
      %v902 = vadd.f32 %v901, %v887
      %v903 = vadd.f32 %v902, %v892
      %v904 = vrot.slane %v903, 4
      %v905 = vadd.f32 %v903, %v904
      %v906 = vrot.slane %v905, 2
      %v907 = vadd.f32 %v905, %v906
      %v908 = vrot.slane %v907, 1
      %v909 = vadd.f32 %v907, %v908
      %v910 = vrcp.pop 64.0
      %v911 = vmul.f32 %v909, %v910
      %v912 = vsub.f32 %v857, %v911
      %v913 = vsub.f32 %v862, %v911
      %v914 = vsub.f32 %v867, %v911
      %v915 = vsub.f32 %v872, %v911
      %v916 = vsub.f32 %v877, %v911
      %v917 = vsub.f32 %v882, %v911
      %v918 = vsub.f32 %v887, %v911
      %v919 = vsub.f32 %v892, %v911
      %v920 = vmul.f32 %v912, %v912
      %v921 = vmul.f32 %v913, %v913
      %v922 = vmul.f32 %v914, %v914
      %v923 = vmul.f32 %v915, %v915
      %v924 = vmul.f32 %v916, %v916
      %v925 = vmul.f32 %v917, %v917
      %v926 = vmul.f32 %v918, %v918
      %v927 = vmul.f32 %v919, %v919
      %v928 = vadd.f32 %v920, %v921
      %v929 = vadd.f32 %v928, %v922
      %v930 = vadd.f32 %v929, %v923
      %v931 = vadd.f32 %v930, %v924
      %v932 = vadd.f32 %v931, %v925
      %v933 = vadd.f32 %v932, %v926
      %v934 = vadd.f32 %v933, %v927
      %v935 = vrot.slane %v934, 4
      %v936 = vadd.f32 %v934, %v935
      %v937 = vrot.slane %v936, 2
      %v938 = vadd.f32 %v936, %v937
      %v939 = vrot.slane %v938, 1
      %v940 = vadd.f32 %v938, %v939
      %v941 = vmul.f32 %v940, %v910
      %v942 = vadd.f32 %v941, 1e-05
      %v943 = vrsqrt.pop %v942
      %v944 = vmul.f32 %v912, %v943
      %v945 = vmul.f32 %v913, %v943
      %v946 = vmul.f32 %v914, %v943
      %v947 = vmul.f32 %v915, %v943
      %v948 = vmul.f32 %v916, %v943
      %v949 = vmul.f32 %v917, %v943
      %v950 = vmul.f32 %v918, %v943
      %v951 = vmul.f32 %v919, %v943
      %v953 = vlaneseq
      %v954 = vshrl.u32 %v953, 7
      %v955 = vsub.s32 0, %v954
      %v956 = vrot.slane %v895, %v955
      %v958 = vmul.f32 %v944, %v956
      %v959 = vmul.f32 %v945, %v956
      %v960 = vmul.f32 %v946, %v956
      %v961 = vmul.f32 %v947, %v956
      %v962 = vmul.f32 %v948, %v956
      %v963 = vmul.f32 %v949, %v956
      %v964 = vmul.f32 %v950, %v956
      %v965 = vmul.f32 %v951, %v956
      %v967 = vlaneseq
      %v968 = vshrl.u32 %v967, 7
      %v969 = vsub.s32 0, %v968
      %v970 = vrot.slane %v896, %v969
      %v972 = vadd.f32 %v958, %v970
      %v973 = vadd.f32 %v959, %v970
      %v974 = vadd.f32 %v960, %v970
      %v975 = vadd.f32 %v961, %v970
      %v976 = vadd.f32 %v962, %v970
      %v977 = vadd.f32 %v963, %v970
      %v978 = vadd.f32 %v964, %v970
      %v979 = vadd.f32 %v965, %v970
      %v980 = vmax.f32 %v972, 0.0
      %v981 = vmax.f32 %v973, 0.0
      %v982 = vmax.f32 %v974, 0.0
      %v983 = vmax.f32 %v975, 0.0
      %v984 = vmax.f32 %v976, 0.0
      %v985 = vmax.f32 %v977, 0.0
      %v986 = vmax.f32 %v978, 0.0
      %v987 = vmax.f32 %v979, 0.0
      %988 = vst [vmem:[#allocation2] sm:$0xff] %v980
      %989 = vst [vmem:[#allocation2 + $0x8] sm:$0xff] %v981
      %990 = vst [vmem:[#allocation2 + $0x10] sm:$0xff] %v982
      %991 = vst [vmem:[#allocation2 + $0x18] sm:$0xff] %v983
      %992 = vst [vmem:[#allocation2 + $0x20] sm:$0xff] %v984
      %993 = vst [vmem:[#allocation2 + $0x28] sm:$0xff] %v985
      %994 = vst [vmem:[#allocation2 + $0x30] sm:$0xff] %v986
      %995 = vst [vmem:[#allocation2 + $0x38] sm:$0xff] %v987
      %v996 = vld [vmem:[#allocation2] ss:$2 sm:$0xff]
      %s997 = scalar_lea.vmem [#allocation2], 16
      %v998 = vld [vmem:[%s997] ss:$2 sm:$0xff]
      %s999 = scalar_lea.vmem [#allocation2], 32
      %v1000 = vld [vmem:[%s999] ss:$2 sm:$0xff]
      %s1001 = scalar_lea.vmem [#allocation2], 48
      %v1002 = vld [vmem:[%s1001] ss:$2 sm:$0xff]
      %s1003 = scalar_lea.vmem [#allocation2], 1
      %v1004 = vld [vmem:[%s1003] ss:$2 sm:$0xff]
      %s1005 = scalar_lea.vmem [#allocation2], 17
      %v1006 = vld [vmem:[%s1005] ss:$2 sm:$0xff]
      %s1007 = scalar_lea.vmem [#allocation2], 33
      %v1008 = vld [vmem:[%s1007] ss:$2 sm:$0xff]
      %s1009 = scalar_lea.vmem [#allocation2], 49
      %v1010 = vld [vmem:[%s1009] ss:$2 sm:$0xff]
      %v1011 = vmax.f32 %v996, %v1004
      %v1012 = vmax.f32 %v998, %v1006
      %v1013 = vmax.f32 %v1000, %v1008
      %v1014 = vmax.f32 %v1002, %v1010
      %1015 = vst [vmem:[#allocation3] sm:$0x3] 0.0
      %1016 = vst [vmem:[#allocation3 + $0x18] sm:$0x3] 0.0
      %1017 = vst [vmem:[#allocation3 + $0x12] sm:$0x3] 0.0
      %1018 = vst [vmem:[#allocation3 + $0x2a] sm:$0x3] 0.0
      %1019 = vst [vmem:[#allocation3 + $0x2] sm:$0xff] %v1011
      %1020 = vst [vmem:[#allocation3 + $0xa] sm:$0xff] %v1012
      %1021 = vst [vmem:[#allocation3 + $0x1a] sm:$0xff] %v1013
      %1022 = vst [vmem:[#allocation3 + $0x22] sm:$0xff] %v1014
      %v1023 = vld [vmem:[#allocation3] sm:$0xff]
      %v1024 = vld [vmem:[#allocation3 + $0x8] sm:$0xff]
      %v1025 = vld [vmem:[#allocation3 + $0x18] sm:$0xff]
      %v1026 = vld [vmem:[#allocation3 + $0x20] sm:$0xff]
      %v1027 = vld [vmem:[%s5] sm:$0xff]
      %v1028 = vld [vmem:[%s5 + $0x8] sm:$0xff]
      %v1029 = vld [vmem:[%s5 + $0x10] sm:$0xff]
      %v1030 = vld [vmem:[%s5 + $0x18] sm:$0xff]
      %v1031 = vld [vmem:[%s5 + $0x20] sm:$0xff]
      %v1032 = vld [vmem:[%s5 + $0x28] sm:$0xff]
      %v1033 = vld [vmem:[%s5 + $0x30] sm:$0xff]
      %v1034 = vld [vmem:[%s5 + $0x38] sm:$0xff]
      %v1035 = vld [vmem:[%s5 + $0x40] sm:$0xff]
      %v1036 = vld [vmem:[%s5 + $0x48] sm:$0xff]
      %v1037 = vld [vmem:[%s5 + $0x50] sm:$0xff]
      %v1038 = vld [vmem:[%s5 + $0x58] sm:$0xff]
      %v1039 = vld [vmem:[%s5 + $0x60] sm:$0xff]
      %v1040 = vld [vmem:[%s5 + $0x68] sm:$0xff]
      %v1041 = vld [vmem:[%s5 + $0x70] sm:$0xff]
      %v1042 = vld [vmem:[%s5 + $0x78] sm:$0xff]
      %v1043 = vld [vmem:[#allocation3 + $0x1] sm:$0xff]
      %v1044 = vld [vmem:[#allocation3 + $0x9] sm:$0xff]
      %v1045 = vld [vmem:[#allocation3 + $0x19] sm:$0xff]
      %v1046 = vld [vmem:[#allocation3 + $0x21] sm:$0xff]
      %s1047 = scalar_lea.vmem %s5, 128
      %v1048 = vld [vmem:[%s1047] sm:$0xff]
      %v1049 = vld [vmem:[%s1047 + $0x8] sm:$0xff]
      %v1050 = vld [vmem:[%s1047 + $0x10] sm:$0xff]
      %v1051 = vld [vmem:[%s1047 + $0x18] sm:$0xff]
      %v1052 = vld [vmem:[%s1047 + $0x20] sm:$0xff]
      %v1053 = vld [vmem:[%s1047 + $0x28] sm:$0xff]
      %v1054 = vld [vmem:[%s1047 + $0x30] sm:$0xff]
      %v1055 = vld [vmem:[%s1047 + $0x38] sm:$0xff]
      %v1056 = vld [vmem:[%s1047 + $0x40] sm:$0xff]
      %v1057 = vld [vmem:[%s1047 + $0x48] sm:$0xff]
      %v1058 = vld [vmem:[%s1047 + $0x50] sm:$0xff]
      %v1059 = vld [vmem:[%s1047 + $0x58] sm:$0xff]
      %v1060 = vld [vmem:[%s1047 + $0x60] sm:$0xff]
      %v1061 = vld [vmem:[%s1047 + $0x68] sm:$0xff]
      %v1062 = vld [vmem:[%s1047 + $0x70] sm:$0xff]
      %v1063 = vld [vmem:[%s1047 + $0x78] sm:$0xff]
      %1064 = vmatprep.subr.mxu0 0.0
      %1065 = vmatpush1.msra.mxu0 %v1048
      %1066 = vmatprep.subr.mxu0 0.0
      %1067 = vmatpush1.msra.mxu0 %v1049
      %1068 = vmatprep.subr.mxu0 0.0
      %1069 = vmatpush1.msra.mxu0 %v1050
      %1070 = vmatprep.subr.mxu0 0.0
      %1071 = vmatpush1.msra.mxu0 %v1051
      %1072 = vmatprep.subr.mxu0 0.0
      %1073 = vmatpush1.msra.mxu0 %v1052
      %1074 = vmatprep.subr.mxu0 0.0
      %1075 = vmatpush1.msra.mxu0 %v1053
      %1076 = vmatprep.subr.mxu0 0.0
      %1077 = vmatpush1.msra.mxu0 %v1054
      %1078 = vmatprep.subr.mxu0 0.0
      %1079 = vmatpush1.msra.mxu0 %v1055
      %1080 = vmatprep.subr.mxu0 0.0
      %1081 = vmatpush1.msra.mxu0 %v1056
      %1082 = vmatprep.subr.mxu0 0.0
      %1083 = vmatpush1.msra.mxu0 %v1057
      %1084 = vmatprep.subr.mxu0 0.0
      %1085 = vmatpush1.msra.mxu0 %v1058
      %1086 = vmatprep.subr.mxu0 0.0
      %1087 = vmatpush1.msra.mxu0 %v1059
      %1088 = vmatprep.subr.mxu0 0.0
      %1089 = vmatpush1.msra.mxu0 %v1060
      %1090 = vmatprep.subr.mxu0 0.0
      %1091 = vmatpush1.msra.mxu0 %v1061
      %1092 = vmatprep.subr.mxu0 0.0
      %1093 = vmatpush1.msra.mxu0 %v1062
      %1094 = vmatprep.subr.mxu0 0.0
      %1095 = vmatpush1.msra.mxu0 %v1063
      %1096 = vmatprep.subr.mxu0 0.0
      %1097 = vmatpush1.msra.mxu0 0.0
      %1098 = vmatprep.subr.mxu0 0.0
      %1099 = vmatpush1.msra.mxu0 0.0
      %1100 = vmatprep.subr.mxu0 0.0
      %1101 = vmatpush1.msra.mxu0 0.0
      %1102 = vmatprep.subr.mxu0 0.0
      %1103 = vmatpush1.msra.mxu0 0.0
      %1104 = vmatprep.subr.mxu0 0.0
      %1105 = vmatpush1.msra.mxu0 0.0
      %1106 = vmatprep.subr.mxu0 0.0
      %1107 = vmatpush1.msra.mxu0 0.0
      %1108 = vmatprep.subr.mxu0 0.0
      %1109 = vmatpush1.msra.mxu0 0.0
      %1110 = vmatprep.subr.mxu0 0.0
      %1111 = vmatpush1.msra.mxu0 0.0
      %1112 = vmatprep.subr.mxu0 0.0
      %1113 = vmatpush1.msra.mxu0 0.0
      %1114 = vmatprep.subr.mxu0 0.0
      %1115 = vmatpush1.msra.mxu0 0.0
      %1116 = vmatprep.subr.mxu0 0.0
      %1117 = vmatpush1.msra.mxu0 0.0
      %1118 = vmatprep.subr.mxu0 0.0
      %1119 = vmatpush1.msra.mxu0 0.0
      %1120 = vmatprep.subr.mxu0 0.0
      %1121 = vmatpush1.msra.mxu0 0.0
      %1122 = vmatprep.subr.mxu0 0.0
      %1123 = vmatpush1.msra.mxu0 0.0
      %1124 = vmatprep.subr.mxu0 0.0
      %1125 = vmatpush1.msra.mxu0 0.0
      %1126 = vmatprep.subr.mxu0 0.0
      %1127 = vmatpush1.msra.mxu0 0.0
      %1128 = vmatprep.mubr.f32.mxu0 0.0
      %1129 = vmatmul.mubr.f32.gmra.mrb[0].mxu0 %v1043
      %v1130 = vpop.f32.mrb[0].mxu0
      %v1131 = vadd.f32 0.0, %v1130
      %v1132 = vpop.f32.mrb[0].mxu0
      %1133 = vmatprep.mubr.f32.mxu0 0.0
      %1134 = vmatmul.mubr.f32.gmra.mrb[0].mxu0 %v1044
      %v1135 = vpop.f32.mrb[0].mxu0
      %v1136 = vadd.f32 0.0, %v1135
      %v1137 = vpop.f32.mrb[0].mxu0
      %1138 = vmatprep.mubr.f32.mxu0 0.0
      %1139 = vmatmul.mubr.f32.gmra.mrb[0].mxu0 %v1045
      %v1140 = vpop.f32.mrb[0].mxu0
      %v1141 = vadd.f32 0.0, %v1140
      %v1142 = vpop.f32.mrb[0].mxu0
      %1143 = vmatprep.mubr.f32.mxu0 0.0
      %1144 = vmatmul.mubr.f32.gmra.mrb[0].mxu0 %v1046
      %v1145 = vpop.f32.mrb[0].mxu0
      %v1146 = vadd.f32 0.0, %v1145
      %v1147 = vpop.f32.mrb[0].mxu0
      %1148 = vdwg.mxu0
      %1149 = vmatprep.subr.mxu0 0.0
      %1150 = vmatpush1.msra.mxu0 %v1027
      %1151 = vmatprep.subr.mxu0 0.0
      %1152 = vmatpush1.msra.mxu0 %v1028
      %1153 = vmatprep.subr.mxu0 0.0
      %1154 = vmatpush1.msra.mxu0 %v1029
      %1155 = vmatprep.subr.mxu0 0.0
      %1156 = vmatpush1.msra.mxu0 %v1030
      %1157 = vmatprep.subr.mxu0 0.0
      %1158 = vmatpush1.msra.mxu0 %v1031
      %1159 = vmatprep.subr.mxu0 0.0
      %1160 = vmatpush1.msra.mxu0 %v1032
      %1161 = vmatprep.subr.mxu0 0.0
      %1162 = vmatpush1.msra.mxu0 %v1033
      %1163 = vmatprep.subr.mxu0 0.0
      %1164 = vmatpush1.msra.mxu0 %v1034
      %1165 = vmatprep.subr.mxu0 0.0
      %1166 = vmatpush1.msra.mxu0 %v1035
      %1167 = vmatprep.subr.mxu0 0.0
      %1168 = vmatpush1.msra.mxu0 %v1036
      %1169 = vmatprep.subr.mxu0 0.0
      %1170 = vmatpush1.msra.mxu0 %v1037
      %1171 = vmatprep.subr.mxu0 0.0
      %1172 = vmatpush1.msra.mxu0 %v1038
      %1173 = vmatprep.subr.mxu0 0.0
      %1174 = vmatpush1.msra.mxu0 %v1039
      %1175 = vmatprep.subr.mxu0 0.0
      %1176 = vmatpush1.msra.mxu0 %v1040
      %1177 = vmatprep.subr.mxu0 0.0
      %1178 = vmatpush1.msra.mxu0 %v1041
      %1179 = vmatprep.subr.mxu0 0.0
      %1180 = vmatpush1.msra.mxu0 %v1042
      %1181 = vmatprep.subr.mxu0 0.0
      %1182 = vmatpush1.msra.mxu0 0.0
      %1183 = vmatprep.subr.mxu0 0.0
      %1184 = vmatpush1.msra.mxu0 0.0
      %1185 = vmatprep.subr.mxu0 0.0
      %1186 = vmatpush1.msra.mxu0 0.0
      %1187 = vmatprep.subr.mxu0 0.0
      %1188 = vmatpush1.msra.mxu0 0.0
      %1189 = vmatprep.subr.mxu0 0.0
      %1190 = vmatpush1.msra.mxu0 0.0
      %1191 = vmatprep.subr.mxu0 0.0
      %1192 = vmatpush1.msra.mxu0 0.0
      %1193 = vmatprep.subr.mxu0 0.0
      %1194 = vmatpush1.msra.mxu0 0.0
      %1195 = vmatprep.subr.mxu0 0.0
      %1196 = vmatpush1.msra.mxu0 0.0
      %1197 = vmatprep.subr.mxu0 0.0
      %1198 = vmatpush1.msra.mxu0 0.0
      %1199 = vmatprep.subr.mxu0 0.0
      %1200 = vmatpush1.msra.mxu0 0.0
      %1201 = vmatprep.subr.mxu0 0.0
      %1202 = vmatpush1.msra.mxu0 0.0
      %1203 = vmatprep.subr.mxu0 0.0
      %1204 = vmatpush1.msra.mxu0 0.0
      %1205 = vmatprep.subr.mxu0 0.0
      %1206 = vmatpush1.msra.mxu0 0.0
      %1207 = vmatprep.subr.mxu0 0.0
      %1208 = vmatpush1.msra.mxu0 0.0
      %1209 = vmatprep.subr.mxu0 0.0
      %1210 = vmatpush1.msra.mxu0 0.0
      %1211 = vmatprep.subr.mxu0 0.0
      %1212 = vmatpush1.msra.mxu0 0.0
      %1213 = vmatprep.mubr.f32.mxu0 0.0
      %1214 = vmatmul.mubr.f32.gmra.mrb[0].mxu0 %v1023
      %v1215 = vpop.f32.mrb[0].mxu0
      %v1216 = vadd.f32 %v1131, %v1215
      %v1217 = vpop.f32.mrb[0].mxu0
      %1218 = vmatprep.mubr.f32.mxu0 0.0
      %1219 = vmatmul.mubr.f32.gmra.mrb[0].mxu0 %v1024
      %v1220 = vpop.f32.mrb[0].mxu0
      %v1221 = vadd.f32 %v1136, %v1220
      %v1222 = vpop.f32.mrb[0].mxu0
      %1223 = vmatprep.mubr.f32.mxu0 0.0
      %1224 = vmatmul.mubr.f32.gmra.mrb[0].mxu0 %v1025
      %v1225 = vpop.f32.mrb[0].mxu0
      %v1226 = vadd.f32 %v1141, %v1225
      %v1227 = vpop.f32.mrb[0].mxu0
      %1228 = vmatprep.mubr.f32.mxu0 0.0
      %1229 = vmatmul.mubr.f32.gmra.mrb[0].mxu0 %v1026
      %v1230 = vpop.f32.mrb[0].mxu0
      %v1231 = vadd.f32 %v1146, %v1230
      %v1232 = vpop.f32.mrb[0].mxu0
      %1233 = vdwg.mxu0
      %v1234 = vld [vmem:[#allocation3 + $0x2] sm:$0xff]
      %v1235 = vld [vmem:[#allocation3 + $0xa] sm:$0xff]
      %v1236 = vld [vmem:[#allocation3 + $0x1a] sm:$0xff]
      %v1237 = vld [vmem:[#allocation3 + $0x22] sm:$0xff]
      %s1238 = scalar_lea.vmem %s5, 256
      %v1239 = vld [vmem:[%s1238] sm:$0xff]
      %v1240 = vld [vmem:[%s1238 + $0x8] sm:$0xff]
      %v1241 = vld [vmem:[%s1238 + $0x10] sm:$0xff]
      %v1242 = vld [vmem:[%s1238 + $0x18] sm:$0xff]
      %v1243 = vld [vmem:[%s1238 + $0x20] sm:$0xff]
      %v1244 = vld [vmem:[%s1238 + $0x28] sm:$0xff]
      %v1245 = vld [vmem:[%s1238 + $0x30] sm:$0xff]
      %v1246 = vld [vmem:[%s1238 + $0x38] sm:$0xff]
      %v1247 = vld [vmem:[%s1238 + $0x40] sm:$0xff]
      %v1248 = vld [vmem:[%s1238 + $0x48] sm:$0xff]
      %v1249 = vld [vmem:[%s1238 + $0x50] sm:$0xff]
      %v1250 = vld [vmem:[%s1238 + $0x58] sm:$0xff]
      %v1251 = vld [vmem:[%s1238 + $0x60] sm:$0xff]
      %v1252 = vld [vmem:[%s1238 + $0x68] sm:$0xff]
      %v1253 = vld [vmem:[%s1238 + $0x70] sm:$0xff]
      %v1254 = vld [vmem:[%s1238 + $0x78] sm:$0xff]
      %1255 = vmatprep.subr.mxu0 0.0
      %1256 = vmatpush1.msra.mxu0 %v1239
      %1257 = vmatprep.subr.mxu0 0.0
      %1258 = vmatpush1.msra.mxu0 %v1240
      %1259 = vmatprep.subr.mxu0 0.0
      %1260 = vmatpush1.msra.mxu0 %v1241
      %1261 = vmatprep.subr.mxu0 0.0
      %1262 = vmatpush1.msra.mxu0 %v1242
      %1263 = vmatprep.subr.mxu0 0.0
      %1264 = vmatpush1.msra.mxu0 %v1243
      %1265 = vmatprep.subr.mxu0 0.0
      %1266 = vmatpush1.msra.mxu0 %v1244
      %1267 = vmatprep.subr.mxu0 0.0
      %1268 = vmatpush1.msra.mxu0 %v1245
      %1269 = vmatprep.subr.mxu0 0.0
      %1270 = vmatpush1.msra.mxu0 %v1246
      %1271 = vmatprep.subr.mxu0 0.0
      %1272 = vmatpush1.msra.mxu0 %v1247
      %1273 = vmatprep.subr.mxu0 0.0
      %1274 = vmatpush1.msra.mxu0 %v1248
      %1275 = vmatprep.subr.mxu0 0.0
      %1276 = vmatpush1.msra.mxu0 %v1249
      %1277 = vmatprep.subr.mxu0 0.0
      %1278 = vmatpush1.msra.mxu0 %v1250
      %1279 = vmatprep.subr.mxu0 0.0
      %1280 = vmatpush1.msra.mxu0 %v1251
      %1281 = vmatprep.subr.mxu0 0.0
      %1282 = vmatpush1.msra.mxu0 %v1252
      %1283 = vmatprep.subr.mxu0 0.0
      %1284 = vmatpush1.msra.mxu0 %v1253
      %1285 = vmatprep.subr.mxu0 0.0
      %1286 = vmatpush1.msra.mxu0 %v1254
      %1287 = vmatprep.subr.mxu0 0.0
      %1288 = vmatpush1.msra.mxu0 0.0
      %1289 = vmatprep.subr.mxu0 0.0
      %1290 = vmatpush1.msra.mxu0 0.0
      %1291 = vmatprep.subr.mxu0 0.0
      %1292 = vmatpush1.msra.mxu0 0.0
      %1293 = vmatprep.subr.mxu0 0.0
      %1294 = vmatpush1.msra.mxu0 0.0
      %1295 = vmatprep.subr.mxu0 0.0
      %1296 = vmatpush1.msra.mxu0 0.0
      %1297 = vmatprep.subr.mxu0 0.0
      %1298 = vmatpush1.msra.mxu0 0.0
      %1299 = vmatprep.subr.mxu0 0.0
      %1300 = vmatpush1.msra.mxu0 0.0
      %1301 = vmatprep.subr.mxu0 0.0
      %1302 = vmatpush1.msra.mxu0 0.0
      %1303 = vmatprep.subr.mxu0 0.0
      %1304 = vmatpush1.msra.mxu0 0.0
      %1305 = vmatprep.subr.mxu0 0.0
      %1306 = vmatpush1.msra.mxu0 0.0
      %1307 = vmatprep.subr.mxu0 0.0
      %1308 = vmatpush1.msra.mxu0 0.0
      %1309 = vmatprep.subr.mxu0 0.0
      %1310 = vmatpush1.msra.mxu0 0.0
      %1311 = vmatprep.subr.mxu0 0.0
      %1312 = vmatpush1.msra.mxu0 0.0
      %1313 = vmatprep.subr.mxu0 0.0
      %1314 = vmatpush1.msra.mxu0 0.0
      %1315 = vmatprep.subr.mxu0 0.0
      %1316 = vmatpush1.msra.mxu0 0.0
      %1317 = vmatprep.subr.mxu0 0.0
      %1318 = vmatpush1.msra.mxu0 0.0
      %1319 = vmatprep.mubr.f32.mxu0 0.0
      %1320 = vmatmul.mubr.f32.gmra.mrb[0].mxu0 %v1234
      %v1321 = vpop.f32.mrb[0].mxu0
      %v1322 = vadd.f32 0.0, %v1321
      %v1323 = vpop.f32.mrb[0].mxu0
      %1324 = vmatprep.mubr.f32.mxu0 0.0
      %1325 = vmatmul.mubr.f32.gmra.mrb[0].mxu0 %v1235
      %v1326 = vpop.f32.mrb[0].mxu0
      %v1327 = vadd.f32 0.0, %v1326
      %v1328 = vpop.f32.mrb[0].mxu0
      %1329 = vmatprep.mubr.f32.mxu0 0.0
      %1330 = vmatmul.mubr.f32.gmra.mrb[0].mxu0 %v1236
      %v1331 = vpop.f32.mrb[0].mxu0
      %v1332 = vadd.f32 0.0, %v1331
      %v1333 = vpop.f32.mrb[0].mxu0
      %1334 = vmatprep.mubr.f32.mxu0 0.0
      %1335 = vmatmul.mubr.f32.gmra.mrb[0].mxu0 %v1237
      %v1336 = vpop.f32.mrb[0].mxu0
      %v1337 = vadd.f32 0.0, %v1336
      %v1338 = vpop.f32.mrb[0].mxu0
      %1339 = vdwg.mxu0
      %v1340 = vadd.f32 %v1216, %v1322
      %v1341 = vadd.f32 %v1221, %v1327
      %v1342 = vadd.f32 %v1226, %v1332
      %v1343 = vadd.f32 %v1231, %v1337
      %v1344 = vld [vmem:[#allocation3 + $0x3] sm:$0xff]
      %v1345 = vld [vmem:[#allocation3 + $0xb] sm:$0xff]
      %v1346 = vld [vmem:[#allocation3 + $0x1b] sm:$0xff]
      %v1347 = vld [vmem:[#allocation3 + $0x23] sm:$0xff]
      %s1348 = scalar_lea.vmem %s5, 384
      %v1349 = vld [vmem:[%s1348] sm:$0xff]
      %v1350 = vld [vmem:[%s1348 + $0x8] sm:$0xff]
      %v1351 = vld [vmem:[%s1348 + $0x10] sm:$0xff]
      %v1352 = vld [vmem:[%s1348 + $0x18] sm:$0xff]
      %v1353 = vld [vmem:[%s1348 + $0x20] sm:$0xff]
      %v1354 = vld [vmem:[%s1348 + $0x28] sm:$0xff]
      %v1355 = vld [vmem:[%s1348 + $0x30] sm:$0xff]
      %v1356 = vld [vmem:[%s1348 + $0x38] sm:$0xff]
      %v1357 = vld [vmem:[%s1348 + $0x40] sm:$0xff]
      %v1358 = vld [vmem:[%s1348 + $0x48] sm:$0xff]
      %v1359 = vld [vmem:[%s1348 + $0x50] sm:$0xff]
      %v1360 = vld [vmem:[%s1348 + $0x58] sm:$0xff]
      %v1361 = vld [vmem:[%s1348 + $0x60] sm:$0xff]
      %v1362 = vld [vmem:[%s1348 + $0x68] sm:$0xff]
      %v1363 = vld [vmem:[%s1348 + $0x70] sm:$0xff]
      %v1364 = vld [vmem:[%s1348 + $0x78] sm:$0xff]
      %1365 = vmatprep.subr.mxu0 0.0
      %1366 = vmatpush1.msra.mxu0 %v1349
      %1367 = vmatprep.subr.mxu0 0.0
      %1368 = vmatpush1.msra.mxu0 %v1350
      %1369 = vmatprep.subr.mxu0 0.0
      %1370 = vmatpush1.msra.mxu0 %v1351
      %1371 = vmatprep.subr.mxu0 0.0
      %1372 = vmatpush1.msra.mxu0 %v1352
      %1373 = vmatprep.subr.mxu0 0.0
      %1374 = vmatpush1.msra.mxu0 %v1353
      %1375 = vmatprep.subr.mxu0 0.0
      %1376 = vmatpush1.msra.mxu0 %v1354
      %1377 = vmatprep.subr.mxu0 0.0
      %1378 = vmatpush1.msra.mxu0 %v1355
      %1379 = vmatprep.subr.mxu0 0.0
      %1380 = vmatpush1.msra.mxu0 %v1356
      %1381 = vmatprep.subr.mxu0 0.0
      %1382 = vmatpush1.msra.mxu0 %v1357
      %1383 = vmatprep.subr.mxu0 0.0
      %1384 = vmatpush1.msra.mxu0 %v1358
      %1385 = vmatprep.subr.mxu0 0.0
      %1386 = vmatpush1.msra.mxu0 %v1359
      %1387 = vmatprep.subr.mxu0 0.0
      %1388 = vmatpush1.msra.mxu0 %v1360
      %1389 = vmatprep.subr.mxu0 0.0
      %1390 = vmatpush1.msra.mxu0 %v1361
      %1391 = vmatprep.subr.mxu0 0.0
      %1392 = vmatpush1.msra.mxu0 %v1362
      %1393 = vmatprep.subr.mxu0 0.0
      %1394 = vmatpush1.msra.mxu0 %v1363
      %1395 = vmatprep.subr.mxu0 0.0
      %1396 = vmatpush1.msra.mxu0 %v1364
      %1397 = vmatprep.subr.mxu0 0.0
      %1398 = vmatpush1.msra.mxu0 0.0
      %1399 = vmatprep.subr.mxu0 0.0
      %1400 = vmatpush1.msra.mxu0 0.0
      %1401 = vmatprep.subr.mxu0 0.0
      %1402 = vmatpush1.msra.mxu0 0.0
      %1403 = vmatprep.subr.mxu0 0.0
      %1404 = vmatpush1.msra.mxu0 0.0
      %1405 = vmatprep.subr.mxu0 0.0
      %1406 = vmatpush1.msra.mxu0 0.0
      %1407 = vmatprep.subr.mxu0 0.0
      %1408 = vmatpush1.msra.mxu0 0.0
      %1409 = vmatprep.subr.mxu0 0.0
      %1410 = vmatpush1.msra.mxu0 0.0
      %1411 = vmatprep.subr.mxu0 0.0
      %1412 = vmatpush1.msra.mxu0 0.0
      %1413 = vmatprep.subr.mxu0 0.0
      %1414 = vmatpush1.msra.mxu0 0.0
      %1415 = vmatprep.subr.mxu0 0.0
      %1416 = vmatpush1.msra.mxu0 0.0
      %1417 = vmatprep.subr.mxu0 0.0
      %1418 = vmatpush1.msra.mxu0 0.0
      %1419 = vmatprep.subr.mxu0 0.0
      %1420 = vmatpush1.msra.mxu0 0.0
      %1421 = vmatprep.subr.mxu0 0.0
      %1422 = vmatpush1.msra.mxu0 0.0
      %1423 = vmatprep.subr.mxu0 0.0
      %1424 = vmatpush1.msra.mxu0 0.0
      %1425 = vmatprep.subr.mxu0 0.0
      %1426 = vmatpush1.msra.mxu0 0.0
      %1427 = vmatprep.subr.mxu0 0.0
      %1428 = vmatpush1.msra.mxu0 0.0
      %1429 = vmatprep.mubr.f32.mxu0 0.0
      %1430 = vmatmul.mubr.f32.gmra.mrb[0].mxu0 %v1344
      %v1431 = vpop.f32.mrb[0].mxu0
      %v1432 = vadd.f32 0.0, %v1431
      %v1433 = vpop.f32.mrb[0].mxu0
      %1434 = vmatprep.mubr.f32.mxu0 0.0
      %1435 = vmatmul.mubr.f32.gmra.mrb[0].mxu0 %v1345
      %v1436 = vpop.f32.mrb[0].mxu0
      %v1437 = vadd.f32 0.0, %v1436
      %v1438 = vpop.f32.mrb[0].mxu0
      %1439 = vmatprep.mubr.f32.mxu0 0.0
      %1440 = vmatmul.mubr.f32.gmra.mrb[0].mxu0 %v1346
      %v1441 = vpop.f32.mrb[0].mxu0
      %v1442 = vadd.f32 0.0, %v1441
      %v1443 = vpop.f32.mrb[0].mxu0
      %1444 = vmatprep.mubr.f32.mxu0 0.0
      %1445 = vmatmul.mubr.f32.gmra.mrb[0].mxu0 %v1347
      %v1446 = vpop.f32.mrb[0].mxu0
      %v1447 = vadd.f32 0.0, %v1446
      %v1448 = vpop.f32.mrb[0].mxu0
      %1449 = vdwg.mxu0
      %v1450 = vadd.f32 %v1340, %v1432
      %v1451 = vadd.f32 %v1341, %v1437
      %v1452 = vadd.f32 %v1342, %v1442
      %v1453 = vadd.f32 %v1343, %v1447
      %v1454 = vld [vmem:[#allocation3 + $0x4] sm:$0xff]
      %v1455 = vld [vmem:[#allocation3 + $0xc] sm:$0xff]
      %v1456 = vld [vmem:[#allocation3 + $0x1c] sm:$0xff]
      %v1457 = vld [vmem:[#allocation3 + $0x24] sm:$0xff]
      %s1458 = scalar_lea.vmem %s5, 512
      %v1459 = vld [vmem:[%s1458] sm:$0xff]
      %v1460 = vld [vmem:[%s1458 + $0x8] sm:$0xff]
      %v1461 = vld [vmem:[%s1458 + $0x10] sm:$0xff]
      %v1462 = vld [vmem:[%s1458 + $0x18] sm:$0xff]
      %v1463 = vld [vmem:[%s1458 + $0x20] sm:$0xff]
      %v1464 = vld [vmem:[%s1458 + $0x28] sm:$0xff]
      %v1465 = vld [vmem:[%s1458 + $0x30] sm:$0xff]
      %v1466 = vld [vmem:[%s1458 + $0x38] sm:$0xff]
      %v1467 = vld [vmem:[%s1458 + $0x40] sm:$0xff]
      %v1468 = vld [vmem:[%s1458 + $0x48] sm:$0xff]
      %v1469 = vld [vmem:[%s1458 + $0x50] sm:$0xff]
      %v1470 = vld [vmem:[%s1458 + $0x58] sm:$0xff]
      %v1471 = vld [vmem:[%s1458 + $0x60] sm:$0xff]
      %v1472 = vld [vmem:[%s1458 + $0x68] sm:$0xff]
      %v1473 = vld [vmem:[%s1458 + $0x70] sm:$0xff]
      %v1474 = vld [vmem:[%s1458 + $0x78] sm:$0xff]
      %1475 = vmatprep.subr.mxu0 0.0
      %1476 = vmatpush1.msra.mxu0 %v1459
      %1477 = vmatprep.subr.mxu0 0.0
      %1478 = vmatpush1.msra.mxu0 %v1460
      %1479 = vmatprep.subr.mxu0 0.0
      %1480 = vmatpush1.msra.mxu0 %v1461
      %1481 = vmatprep.subr.mxu0 0.0
      %1482 = vmatpush1.msra.mxu0 %v1462
      %1483 = vmatprep.subr.mxu0 0.0
      %1484 = vmatpush1.msra.mxu0 %v1463
      %1485 = vmatprep.subr.mxu0 0.0
      %1486 = vmatpush1.msra.mxu0 %v1464
      %1487 = vmatprep.subr.mxu0 0.0
      %1488 = vmatpush1.msra.mxu0 %v1465
      %1489 = vmatprep.subr.mxu0 0.0
      %1490 = vmatpush1.msra.mxu0 %v1466
      %1491 = vmatprep.subr.mxu0 0.0
      %1492 = vmatpush1.msra.mxu0 %v1467
      %1493 = vmatprep.subr.mxu0 0.0
      %1494 = vmatpush1.msra.mxu0 %v1468
      %1495 = vmatprep.subr.mxu0 0.0
      %1496 = vmatpush1.msra.mxu0 %v1469
      %1497 = vmatprep.subr.mxu0 0.0
      %1498 = vmatpush1.msra.mxu0 %v1470
      %1499 = vmatprep.subr.mxu0 0.0
      %1500 = vmatpush1.msra.mxu0 %v1471
      %1501 = vmatprep.subr.mxu0 0.0
      %1502 = vmatpush1.msra.mxu0 %v1472
      %1503 = vmatprep.subr.mxu0 0.0
      %1504 = vmatpush1.msra.mxu0 %v1473
      %1505 = vmatprep.subr.mxu0 0.0
      %1506 = vmatpush1.msra.mxu0 %v1474
      %1507 = vmatprep.subr.mxu0 0.0
      %1508 = vmatpush1.msra.mxu0 0.0
      %1509 = vmatprep.subr.mxu0 0.0
      %1510 = vmatpush1.msra.mxu0 0.0
      %1511 = vmatprep.subr.mxu0 0.0
      %1512 = vmatpush1.msra.mxu0 0.0
      %1513 = vmatprep.subr.mxu0 0.0
      %1514 = vmatpush1.msra.mxu0 0.0
      %1515 = vmatprep.subr.mxu0 0.0
      %1516 = vmatpush1.msra.mxu0 0.0
      %1517 = vmatprep.subr.mxu0 0.0
      %1518 = vmatpush1.msra.mxu0 0.0
      %1519 = vmatprep.subr.mxu0 0.0
      %1520 = vmatpush1.msra.mxu0 0.0
      %1521 = vmatprep.subr.mxu0 0.0
      %1522 = vmatpush1.msra.mxu0 0.0
      %1523 = vmatprep.subr.mxu0 0.0
      %1524 = vmatpush1.msra.mxu0 0.0
      %1525 = vmatprep.subr.mxu0 0.0
      %1526 = vmatpush1.msra.mxu0 0.0
      %1527 = vmatprep.subr.mxu0 0.0
      %1528 = vmatpush1.msra.mxu0 0.0
      %1529 = vmatprep.subr.mxu0 0.0
      %1530 = vmatpush1.msra.mxu0 0.0
      %1531 = vmatprep.subr.mxu0 0.0
      %1532 = vmatpush1.msra.mxu0 0.0
      %1533 = vmatprep.subr.mxu0 0.0
      %1534 = vmatpush1.msra.mxu0 0.0
      %1535 = vmatprep.subr.mxu0 0.0
      %1536 = vmatpush1.msra.mxu0 0.0
      %1537 = vmatprep.subr.mxu0 0.0
      %1538 = vmatpush1.msra.mxu0 0.0
      %1539 = vmatprep.mubr.f32.mxu0 0.0
      %1540 = vmatmul.mubr.f32.gmra.mrb[0].mxu0 %v1454
      %v1541 = vpop.f32.mrb[0].mxu0
      %v1542 = vadd.f32 0.0, %v1541
      %v1543 = vpop.f32.mrb[0].mxu0
      %1544 = vmatprep.mubr.f32.mxu0 0.0
      %1545 = vmatmul.mubr.f32.gmra.mrb[0].mxu0 %v1455
      %v1546 = vpop.f32.mrb[0].mxu0
      %v1547 = vadd.f32 0.0, %v1546
      %v1548 = vpop.f32.mrb[0].mxu0
      %1549 = vmatprep.mubr.f32.mxu0 0.0
      %1550 = vmatmul.mubr.f32.gmra.mrb[0].mxu0 %v1456
      %v1551 = vpop.f32.mrb[0].mxu0
      %v1552 = vadd.f32 0.0, %v1551
      %v1553 = vpop.f32.mrb[0].mxu0
      %1554 = vmatprep.mubr.f32.mxu0 0.0
      %1555 = vmatmul.mubr.f32.gmra.mrb[0].mxu0 %v1457
      %v1556 = vpop.f32.mrb[0].mxu0
      %v1557 = vadd.f32 0.0, %v1556
      %v1558 = vpop.f32.mrb[0].mxu0
      %1559 = vdwg.mxu0
      %v1560 = vadd.f32 %v1450, %v1542
      %v1561 = vadd.f32 %v1451, %v1547
      %v1562 = vadd.f32 %v1452, %v1552
      %v1563 = vadd.f32 %v1453, %v1557
      %v1564 = vld [vmem:[%s6] sm:$0x1]
      %v1566 = vlaneseq
      %v1567 = vshrl.u32 %v1566, 7
      %v1568 = vsub.s32 0, %v1567
      %v1569 = vrot.slane %v1564, %v1568
      %v1571 = vadd.f32 %v1560, %v1569
      %v1572 = vadd.f32 %v1561, %v1569
      %v1573 = vadd.f32 %v1562, %v1569
      %v1574 = vadd.f32 %v1563, %v1569
      %v1575 = vld [vmem:[%s7] sm:$0x1]
      %v1576 = vld [vmem:[%s8] sm:$0x1]
      %v1577 = vadd.f32 %v1571, %v1572
      %v1578 = vadd.f32 %v1577, %v1573
      %v1579 = vadd.f32 %v1578, %v1574
      %v1580 = vrot.slane %v1579, 4
      %v1581 = vadd.f32 %v1579, %v1580
      %v1582 = vrot.slane %v1581, 2
      %v1583 = vadd.f32 %v1581, %v1582
      %v1584 = vrot.slane %v1583, 1
      %v1585 = vadd.f32 %v1583, %v1584
      %v1586 = vrcp.pop 32.0
      %v1587 = vmul.f32 %v1585, %v1586
      %v1588 = vsub.f32 %v1571, %v1587
      %v1589 = vsub.f32 %v1572, %v1587
      %v1590 = vsub.f32 %v1573, %v1587
      %v1591 = vsub.f32 %v1574, %v1587
      %v1592 = vmul.f32 %v1588, %v1588
      %v1593 = vmul.f32 %v1589, %v1589
      %v1594 = vmul.f32 %v1590, %v1590
      %v1595 = vmul.f32 %v1591, %v1591
      %v1596 = vadd.f32 %v1592, %v1593
      %v1597 = vadd.f32 %v1596, %v1594
      %v1598 = vadd.f32 %v1597, %v1595
      %v1599 = vrot.slane %v1598, 4
      %v1600 = vadd.f32 %v1598, %v1599
      %v1601 = vrot.slane %v1600, 2
      %v1602 = vadd.f32 %v1600, %v1601
      %v1603 = vrot.slane %v1602, 1
      %v1604 = vadd.f32 %v1602, %v1603
      %v1605 = vmul.f32 %v1604, %v1586
      %v1606 = vadd.f32 %v1605, 1e-05
      %v1607 = vrsqrt.pop %v1606
      %v1608 = vmul.f32 %v1588, %v1607
      %v1609 = vmul.f32 %v1589, %v1607
      %v1610 = vmul.f32 %v1590, %v1607
      %v1611 = vmul.f32 %v1591, %v1607
      %v1613 = vlaneseq
      %v1614 = vshrl.u32 %v1613, 7
      %v1615 = vsub.s32 0, %v1614
      %v1616 = vrot.slane %v1575, %v1615
      %v1618 = vmul.f32 %v1608, %v1616
      %v1619 = vmul.f32 %v1609, %v1616
      %v1620 = vmul.f32 %v1610, %v1616
      %v1621 = vmul.f32 %v1611, %v1616
      %v1623 = vlaneseq
      %v1624 = vshrl.u32 %v1623, 7
      %v1625 = vsub.s32 0, %v1624
      %v1626 = vrot.slane %v1576, %v1625
      %v1628 = vadd.f32 %v1618, %v1626
      %v1629 = vadd.f32 %v1619, %v1626
      %v1630 = vadd.f32 %v1620, %v1626
      %v1631 = vadd.f32 %v1621, %v1626
      %v1632 = vmax.f32 %v1628, 0.0
      %v1633 = vmax.f32 %v1629, 0.0
      %v1634 = vmax.f32 %v1630, 0.0
      %v1635 = vmax.f32 %v1631, 0.0
      %1636 = vst [vmem:[#allocation2] sm:$0xff] %v1632
      %1637 = vst [vmem:[#allocation2 + $0x8] sm:$0xff] %v1633
      %1638 = vst [vmem:[#allocation2 + $0x10] sm:$0xff] %v1634
      %1639 = vst [vmem:[#allocation2 + $0x18] sm:$0xff] %v1635
      %v1640 = vld [vmem:[#allocation2] ss:$2 sm:$0xff]
      %s1641 = scalar_lea.vmem [#allocation2], 16
      %v1642 = vld [vmem:[%s1641] ss:$2 sm:$0xff]
      %v1643 = vld [vmem:[%s1003] ss:$2 sm:$0xff]
      %v1644 = vld [vmem:[%s1005] ss:$2 sm:$0xff]
      %v1645 = vmax.f32 %v1640, %v1643
      %v1646 = vmax.f32 %v1642, %v1644
      %1647 = vst [vmem:[%s332] sm:$0xff] %v1645
      %1648 = vst [vmem:[%s332 + $0x8] sm:$0xff] %v1646
      %p1649 = scmp.lt.s32.totalorder %s20, 1
      %s1650 = scalar_select %p1649, %s20, 1
      %s1651 = smul.addr %s1650, 2
      %s1652 = smul.addr %s1651, 8
      %s1653 = scalar_lea.vmem %s9, %s1652
      // Predicated region
      $region57: #{channelnet_forward.1} parent=55 // pred_check
        %p1654 = pneg %p232
      $region58: #{channelnet_forward.1} parent=55 // pred_check_branch
        %1656 = sbr.rel (%p1654) target = $region60
      $region59: #{channelnet_forward.1} parent=55 // pred_region
        _
      $region60: #{channelnet_forward.1} parent=55 // pred_fallthru
        _
    $region56: #{channelnet_forward.1} parent=5 // pred_fallthru
      _
    %p1657 = scmp.le.s32.totalorder 2, %s15
    // Predicated region
    $region61: #{channelnet_forward.1} parent=5 // pred_check
      %p1658 = pneg %p1657
    $region62: #{channelnet_forward.1} parent=5 // pred_check_branch
      %1660 = sbr.rel (%p1658) target = $region64
    $region63: #{channelnet_forward.1} parent=5 // pred_region
      %s1661 = ssub.s32 %s15, 2
      // Predicated region
      $region65: #{channelnet_forward.1} parent=63 // pred_check
        %p1662 = pneg %p238
      $region66: #{channelnet_forward.1} parent=63 // pred_check_branch
        %1664 = sbr.rel (%p1662) target = $region68
      $region67: #{channelnet_forward.1} parent=63 // pred_region
        %p1665 = scmp.lt.s32.totalorder %s21, 1
        %s1666 = scalar_select %p1665, %s21, 1
        %s1667 = smul.addr %s1666, 2
        %s1668 = smul.addr %s1667, 8
        %s1669 = scalar_lea.vmem %s9, %s1668
      $region68: #{channelnet_forward.1} parent=63 // pred_fallthru
        _
    $region64: #{channelnet_forward.1} parent=5 // pred_fallthru
      _
  $region6: #{channelnet_forward.1} parent=0 // loop_footer
    %s19 = sadd.s32 1, %s15
  $region7: #{channelnet_forward.1} parent=0 // loop_footer_branch
    %14 = sbr.rel target = $region3
  $region8: #{channelnet_forward.1} parent=0 // loop_exit
    _

</llo_original>
